<compile_context>
chip_gen: v5e
topology: v5e:2x2
jax: 0.10.0
libtpu: 0.0.40
codegen_flags: <defaults>
</compile_context>

<pallas_src>
import functools
import math

import jax
import jax.numpy as jnp
from jax.experimental import pallas as pl
from jax.experimental.pallas import tpu as pltpu

KSIZE = 7
PAD = 3


def _conv_sigmoid(g_max, g_mean, w_ref, b_ref, col, *, width, hw):
    """Factorized 7x7 (2->1 ch) zero-padded conv + bias + sigmoid.

    g_max / g_mean: (nb, HW) f32 flattened channel-max / channel-mean planes.
    w_ref: (98,) f32 SMEM, layout [ci, ky, kx] (ci=0: max plane, ci=1: mean).
    b_ref: (1,) f32 SMEM.  col: (1, HW) int32, col[0, i] == i % W.
    Returns the (nb, HW) f32 attention plane.
    """
    flat = jax.lax.broadcasted_iota(jnp.int32, (1, hw), 1)

    # ---- dx pass: column-shifted, column-masked copies, shared by all dy ----
    p_max, p_mean = [], []
    for kx in range(KSIZE):
        dx = kx - PAD
        if dx == 0:
            p_max.append(g_max)
            p_mean.append(g_mean)
            continue
        shift = (-dx) % hw                         # static, >= 0
        r_max = pltpu.roll(g_max, shift, 1)        # XLU lane roll
        r_mean = pltpu.roll(g_mean, shift, 1)
        # Source column must stay inside the image (== conv zero padding).
        if dx > 0:
            m = col < (width - dx)
        else:
            m = col >= (-dx)
        p_max.append(jnp.where(m, r_max, 0.0))
        p_mean.append(jnp.where(m, r_mean, 0.0))

    # ---- dy pass: weighted row sums, then one roll + one row mask per dy ----
    acc = None
    for ky in range(KSIZE):
        dy = ky - PAD
        s = None
        for kx in range(KSIZE):
            w_max = w_ref[ky * KSIZE + kx]                       # SMEM scalars
            w_mean = w_ref[KSIZE * KSIZE + ky * KSIZE + kx]
            term = w_max * p_max[kx] + w_mean * p_mean[kx]
            s = term if s is None else s + term
        if dy != 0:
            s = pltpu.roll(s, (-(dy * width)) % hw, 1)
            if dy > 0:
                m = flat < (hw - dy * width)
            else:
                m = flat >= (-dy * width)
            s = jnp.where(m, s, 0.0)
        acc = s if acc is None else acc + s

    return jax.nn.sigmoid(acc + b_ref[0])


def _fused_kernel(w_ref, b_ref, col_ref, x_ref, o_ref, *, width):
    """Single-pass kernel: whole (nb, C, HW) slab resident in VMEM."""
    nb, num_ch, hw = x_ref.shape
    x = x_ref[...]

    # Channel-wise reductions (lane-dense). Max in native dtype, mean in f32.
    # NOTE: when N % nb != 0 the tail grid step reduces over padded/undefined
    # batch rows; inf/NaN can appear in those dead rows but the output store
    # is masked, so results are unaffected.
    g_max = jnp.max(x, axis=1).astype(jnp.float32)
    g_mean = jnp.sum(x, axis=1, dtype=jnp.float32) * (1.0 / num_ch)

    attn = _conv_sigmoid(g_max, g_mean, w_ref, b_ref, col_ref[...],
                         width=width, hw=hw)

    # Apply attention in f32; cast only at the lane-dense store.
    o_ref[...] = (x.astype(jnp.float32) * attn[:, None, :]).astype(o_ref.dtype)


def _attn_kernel(w_ref, b_ref, col_ref, x_ref, attn_ref, max_sc, sum_sc,
                 *, width, num_ch):
    """Pass 1 of the channel-tiled path: running max/sum over C chunks, then
    the conv+sigmoid on the last chunk.  Grid = (batch, C chunks)."""
    c = pl.program_id(1)
    hw = x_ref.shape[-1]

    @pl.when(c == 0)
    def _():
        max_sc[...] = jnp.full_like(max_sc, -jnp.inf)
        sum_sc[...] = jnp.zeros_like(sum_sc)

    x = x_ref[...]                                            # (1, c_blk, HW)
    max_sc[...] = jnp.maximum(max_sc[...], jnp.max(x, axis=1).astype(jnp.float32))
    sum_sc[...] = sum_sc[...] + jnp.sum(x, axis=1, dtype=jnp.float32)

    @pl.when(c == pl.num_programs(1) - 1)
    def _():
        g_mean = sum_sc[...] * (1.0 / num_ch)
        attn = _conv_sigmoid(max_sc[...], g_mean, w_ref, b_ref, col_ref[...],
                             width=width, hw=hw)
        attn_ref[...] = attn[:, None, :]                      # (1, 1, HW) f32


def _apply_kernel(attn_ref, x_ref, o_ref):
    """Pass 2 of the channel-tiled path: out = x * attn (f32 multiply)."""
    attn = attn_ref[...]                                      # (1, 1, HW) f32
    o_ref[...] = (x_ref[...].astype(jnp.float32) * attn).astype(o_ref.dtype)


def spatial_attention(x, weight, bias, *, c_block=None, vmem_budget_bytes=None):
    """x: (N, C, H, W); weight: (1, 2, 7, 7); bias: (1,)."""
    N, C, H, W = x.shape
    HW = H * W
    itemsize = x.dtype.itemsize
    f32 = 4

    x_flat = x.reshape(N, C, HW)                      # free (row-major view)
    w_flat = weight.reshape(-1).astype(jnp.float32)   # (98,) [ci, ky, kx]
    b_flat = bias.reshape(-1).astype(jnp.float32)     # (1,)
    col_idx = (jnp.arange(HW, dtype=jnp.int32) % W).reshape(1, HW)

    # ---- generation-aware VMEM sizing (64 MiB physical on v7x, 128 on v5e/v6e)
    try:
        vmem_cap = int(pltpu.get_tpu_info().vmem_capacity_bytes)
    except Exception:  # pragma: no cover - conservative (v7x-sized) fallback
        vmem_cap = 64 * 1024 * 1024
    vmem_limit = min(vmem_cap * 3 // 4, 64 * 1024 * 1024)   # ~48 MiB v7x, 64 MiB v5e/v6e
    if vmem_budget_bytes is None:
        vmem_budget_bytes = min(vmem_limit * 2 // 3, 40 * 1024 * 1024)

    def _params(sem):
        return pltpu.CompilerParams(dimension_semantics=sem,
                                    vmem_limit_bytes=vmem_limit)

    # Fused-path working set per folded batch element: double-buffered in/out
    # blocks, one f32 working copy of the slab, plus ~24 live f32 (HW,) planes
    # (max/mean, 14 dx-shifted copies, per-dy sum, accumulator, attn, slack).
    per_batch_fused = 4 * C * HW * itemsize + C * HW * f32 + 24 * HW * f32

    if c_block is None and per_batch_fused <= vmem_budget_bytes:
        # ------------------- fused single-pass path -------------------
        nb = max(1, min(N, vmem_budget_bytes // per_batch_fused))
        if N >= 2:
            nb = min(nb, (N + 1) // 2)   # >= 2 grid steps: v7x 2 TCs + overlap
        if nb >= 8:
            nb = (nb // 8) * 8           # sublane-aligned conv planes
        grid = (pl.cdiv(N, nb),)
        # TODO(synk): for badly ragged HW (e.g. 14x14=196) pad HW to a multiple
        # of 128 in the wrapper to keep every store an unmasked lane-dense vst.
        out_flat = pl.pallas_call(
            functools.partial(_fused_kernel, width=W),
            out_shape=jax.ShapeDtypeStruct((N, C, HW), x.dtype),
            grid=grid,
            in_specs=[
                pl.BlockSpec(memory_space=pltpu.MemorySpace.SMEM),   # weights
                pl.BlockSpec(memory_space=pltpu.MemorySpace.SMEM),   # bias
                pl.BlockSpec((1, HW), lambda n: (0, 0)),             # col idx
                pl.BlockSpec((nb, C, HW), lambda n: (n, 0, 0)),      # x
            ],
            out_specs=pl.BlockSpec((nb, C, HW), lambda n: (n, 0, 0)),
            compiler_params=_params(("parallel",)),
        )(w_flat, b_flat, col_idx, x_flat)
        return out_flat.reshape(N, C, H, W)

    # ------------- channel-tiled two-pass path (large C * HW) -------------
    if c_block is None:
        # Largest divisor of C whose double-buffered in+out x blocks fit the
        # budget; prefer multiples of 8 (sublane-aligned second-to-last dim).
        max_cb = max(1, (vmem_budget_bytes - 24 * HW * f32) // (4 * HW * itemsize))
        c_block = 1
        for d in range(1, C + 1):
            if C % d == 0 and d <= max_cb and (d % 8 == 0 or d == C or d == 1):
                c_block = d
    assert C % c_block == 0, "c_block must divide C"
    n_c = C // c_block

    # Pass 1: running channel max/sum -> conv -> sigmoid -> attn plane.
    attn = pl.pallas_call(
        functools.partial(_attn_kernel, width=W, num_ch=C),
        out_shape=jax.ShapeDtypeStruct((N, 1, HW), jnp.float32),
        grid=(N, n_c),
        in_specs=[
            pl.BlockSpec(memory_space=pltpu.MemorySpace.SMEM),       # weights
            pl.BlockSpec(memory_space=pltpu.MemorySpace.SMEM),       # bias
            pl.BlockSpec((1, HW), lambda n, c: (0, 0)),              # col idx
            pl.BlockSpec((1, c_block, HW), lambda n, c: (n, c, 0)),  # x chunk
        ],
        out_specs=pl.BlockSpec((1, 1, HW), lambda n, c: (n, 0, 0)),
        scratch_shapes=[pltpu.VMEM((1, HW), jnp.float32),            # run max
                        pltpu.VMEM((1, HW), jnp.float32)],           # run sum
        compiler_params=_params(("parallel", "arbitrary")),
    )(w_flat, b_flat, col_idx, x_flat)

    # Pass 2: out = x * attn, tiled over (batch, C chunks).
    out_flat = pl.pallas_call(
        _apply_kernel,
        out_shape=jax.ShapeDtypeStruct((N, C, HW), x.dtype),
        grid=(N, n_c),
        in_specs=[
            pl.BlockSpec((1, 1, HW), lambda n, c: (n, 0, 0)),        # attn
            pl.BlockSpec((1, c_block, HW), lambda n, c: (n, c, 0)),  # x chunk
        ],
        out_specs=pl.BlockSpec((1, c_block, HW), lambda n, c: (n, c, 0)),
        compiler_params=_params(("parallel", "parallel")),
    )(attn, x_flat)

    return out_flat.reshape(N, C, H, W)


def _reference(x, weight, bias):
    g_max = jnp.max(x, axis=1, keepdims=True)
    g_mean = jnp.mean(x, axis=1, keepdims=True)
    attn_in = jnp.concatenate([g_max, g_mean], axis=1)
    conv = jax.lax.conv_general_dilated(
        attn_in, weight, window_strides=(1, 1),
        padding=[(PAD, PAD), (PAD, PAD)],
        dimension_numbers=("NCHW", "OIHW", "NCHW"))
    attn = jax.nn.sigmoid(conv + bias.reshape(1, -1, 1, 1))
    return x * attn


if __name__ == "__main__":
    key = jax.random.PRNGKey(0)
    k_x, k_w, k_b, k_x2 = jax.random.split(key, 4)

    # Small shapes consistent with the module: NCHW.
    N, C, H, W = 2, 4, 16, 16
    x = jax.random.normal(k_x, (N, C, H, W), dtype=jnp.float32)

    # Deterministic param init matching nn.Conv2d(2, 1, 7) default bounds.
    fan_in = 2 * KSIZE * KSIZE
    bound = 1.0 / math.sqrt(fan_in)
    weight = jax.random.uniform(k_w, (1, 2, KSIZE, KSIZE),
                                minval=-bound, maxval=bound, dtype=jnp.float32)
    bias = jax.random.uniform(k_b, (1,), minval=-bound, maxval=bound,
                              dtype=jnp.float32)

    # Fused single-pass path.
    out = jax.block_until_ready(spatial_attention(x, weight, bias))
    ref = jax.block_until_ready(_reference(x, weight, bias))
    assert out.shape == (N, C, H, W)
    assert jnp.allclose(out, ref, atol=1e-5, rtol=1e-5), "fused path mismatch"

    # Channel-tiled two-pass path, exercised at a small shape by forcing a
    # channel tile smaller than C (C=16, tile=8 -> 2-step C reduction).
    x2 = jax.random.normal(k_x2, (2, 16, 16, 16), dtype=jnp.float32)
    out2 = jax.block_until_ready(spatial_attention(x2, weight, bias, c_block=8))
    ref2 = jax.block_until_ready(_reference(x2, weight, bias))
    assert jnp.allclose(out2, ref2, atol=1e-5, rtol=1e-5), "tiled path mismatch"

    print("KERNEL_OK")
</pallas_src>

<mosaic_0001>
module attributes {stable_mosaic.version = 11 : i64} {
  func.func @_fused_kernel(%arg0: i32, %arg1: memref<98xf32, #tpu.memory_space<smem>>, %arg2: memref<1xf32, #tpu.memory_space<smem>>, %arg3: memref<1x256xi32, #tpu.memory_space<vmem>>, %arg4: memref<1x4x256xf32, #tpu.memory_space<vmem>>, %arg5: memref<1x4x256xf32, #tpu.memory_space<vmem>>) attributes {dimension_semantics = [#tpu.dimension_semantics<parallel>], iteration_bounds = array<i64: 2>, scalar_prefetch = 0 : i64, scratch_operands = 0 : i64, tpu.core_type = #tpu.core_type<tc>, window_params = [{transform_indices = @transform_0, window_bounds = array<i64: 98>}, {transform_indices = @transform_1, window_bounds = array<i64: 1>}, {pipeline_mode = #tpu.pipeline_mode<synchronous>, transform_indices = @transform_2, window_bounds = array<i64: 1, 256>}, {transform_indices = @transform_3, window_bounds = array<i64: 1, 4, 256>}, {transform_indices = @transform_4, window_bounds = array<i64: 1, 4, 256>}]} {
    %c0 = arith.constant 0 : index
    %c0_0 = arith.constant 0 : index
    %c0_1 = arith.constant 0 : index
    %0 = vector.load %arg4[%c0, %c0_0, %c0_1] : memref<1x4x256xf32, #tpu.memory_space<vmem>>, vector<1x4x256xf32>
    %cst = arith.constant dense<0xFF800000> : vector<1x256xf32>
    %1 = vector.multi_reduction <maximumf>, %0, %cst [1] : vector<1x4x256xf32> to vector<1x256xf32>
    %cst_2 = arith.constant dense<0.000000e+00> : vector<1x256xf32>
    %2 = vector.multi_reduction <add>, %0, %cst_2 [1] : vector<1x4x256xf32> to vector<1x256xf32>
    %cst_3 = arith.constant 2.500000e-01 : f32
    %3 = vector.broadcast %cst_3 : f32 to vector<1x256xf32>
    %4 = arith.mulf %2, %3 : vector<1x256xf32>
    %c0_4 = arith.constant 0 : index
    %c0_5 = arith.constant 0 : index
    %5 = vector.load %arg3[%c0_4, %c0_5] : memref<1x256xi32, #tpu.memory_space<vmem>>, vector<1x256xi32>
    %6 = tpu.iota {dimensions = array<i32: 1>} : vector<1x256xi32>
    %c3_i32 = arith.constant 3 : i32
    %7 = tpu.dynamic_rotate %1 by %c3_i32 dim 1 : vector<1x256xf32>, i32 -> vector<1x256xf32>
    %c3_i32_6 = arith.constant 3 : i32
    %8 = tpu.dynamic_rotate %4 by %c3_i32_6 dim 1 : vector<1x256xf32>, i32 -> vector<1x256xf32>
    %c3_i32_7 = arith.constant 3 : i32
    %9 = vector.broadcast %c3_i32_7 : i32 to vector<1x256xi32>
    %10 = arith.cmpi sge, %5, %9 : vector<1x256xi32>
    %cst_8 = arith.constant 0.000000e+00 : f32
    %11 = vector.broadcast %cst_8 : f32 to vector<1x256xf32>
    %12 = arith.select %10, %7, %11 : vector<1x256xi1>, vector<1x256xf32>
    %cst_9 = arith.constant 0.000000e+00 : f32
    %13 = vector.broadcast %cst_9 : f32 to vector<1x256xf32>
    %14 = arith.select %10, %8, %13 : vector<1x256xi1>, vector<1x256xf32>
    %c2_i32 = arith.constant 2 : i32
    %15 = tpu.dynamic_rotate %1 by %c2_i32 dim 1 : vector<1x256xf32>, i32 -> vector<1x256xf32>
    %c2_i32_10 = arith.constant 2 : i32
    %16 = tpu.dynamic_rotate %4 by %c2_i32_10 dim 1 : vector<1x256xf32>, i32 -> vector<1x256xf32>
    %c2_i32_11 = arith.constant 2 : i32
    %17 = vector.broadcast %c2_i32_11 : i32 to vector<1x256xi32>
    %18 = arith.cmpi sge, %5, %17 : vector<1x256xi32>
    %cst_12 = arith.constant 0.000000e+00 : f32
    %19 = vector.broadcast %cst_12 : f32 to vector<1x256xf32>
    %20 = arith.select %18, %15, %19 : vector<1x256xi1>, vector<1x256xf32>
    %cst_13 = arith.constant 0.000000e+00 : f32
    %21 = vector.broadcast %cst_13 : f32 to vector<1x256xf32>
    %22 = arith.select %18, %16, %21 : vector<1x256xi1>, vector<1x256xf32>
    %c1_i32 = arith.constant 1 : i32
    %23 = tpu.dynamic_rotate %1 by %c1_i32 dim 1 : vector<1x256xf32>, i32 -> vector<1x256xf32>
    %c1_i32_14 = arith.constant 1 : i32
    %24 = tpu.dynamic_rotate %4 by %c1_i32_14 dim 1 : vector<1x256xf32>, i32 -> vector<1x256xf32>
    %c1_i32_15 = arith.constant 1 : i32
    %25 = vector.broadcast %c1_i32_15 : i32 to vector<1x256xi32>
    %26 = arith.cmpi sge, %5, %25 : vector<1x256xi32>
    %cst_16 = arith.constant 0.000000e+00 : f32
    %27 = vector.broadcast %cst_16 : f32 to vector<1x256xf32>
    %28 = arith.select %26, %23, %27 : vector<1x256xi1>, vector<1x256xf32>
    %cst_17 = arith.constant 0.000000e+00 : f32
    %29 = vector.broadcast %cst_17 : f32 to vector<1x256xf32>
    %30 = arith.select %26, %24, %29 : vector<1x256xi1>, vector<1x256xf32>
    %c255_i32 = arith.constant 255 : i32
    %31 = tpu.dynamic_rotate %1 by %c255_i32 dim 1 : vector<1x256xf32>, i32 -> vector<1x256xf32>
    %c255_i32_18 = arith.constant 255 : i32
    %32 = tpu.dynamic_rotate %4 by %c255_i32_18 dim 1 : vector<1x256xf32>, i32 -> vector<1x256xf32>
    %c15_i32 = arith.constant 15 : i32
    %33 = vector.broadcast %c15_i32 : i32 to vector<1x256xi32>
    %34 = arith.cmpi slt, %5, %33 : vector<1x256xi32>
    %cst_19 = arith.constant 0.000000e+00 : f32
    %35 = vector.broadcast %cst_19 : f32 to vector<1x256xf32>
    %36 = arith.select %34, %31, %35 : vector<1x256xi1>, vector<1x256xf32>
    %cst_20 = arith.constant 0.000000e+00 : f32
    %37 = vector.broadcast %cst_20 : f32 to vector<1x256xf32>
    %38 = arith.select %34, %32, %37 : vector<1x256xi1>, vector<1x256xf32>
    %c254_i32 = arith.constant 254 : i32
    %39 = tpu.dynamic_rotate %1 by %c254_i32 dim 1 : vector<1x256xf32>, i32 -> vector<1x256xf32>
    %c254_i32_21 = arith.constant 254 : i32
    %40 = tpu.dynamic_rotate %4 by %c254_i32_21 dim 1 : vector<1x256xf32>, i32 -> vector<1x256xf32>
    %c14_i32 = arith.constant 14 : i32
    %41 = vector.broadcast %c14_i32 : i32 to vector<1x256xi32>
    %42 = arith.cmpi slt, %5, %41 : vector<1x256xi32>
    %cst_22 = arith.constant 0.000000e+00 : f32
    %43 = vector.broadcast %cst_22 : f32 to vector<1x256xf32>
    %44 = arith.select %42, %39, %43 : vector<1x256xi1>, vector<1x256xf32>
    %cst_23 = arith.constant 0.000000e+00 : f32
    %45 = vector.broadcast %cst_23 : f32 to vector<1x256xf32>
    %46 = arith.select %42, %40, %45 : vector<1x256xi1>, vector<1x256xf32>
    %c253_i32 = arith.constant 253 : i32
    %47 = tpu.dynamic_rotate %1 by %c253_i32 dim 1 : vector<1x256xf32>, i32 -> vector<1x256xf32>
    %c253_i32_24 = arith.constant 253 : i32
    %48 = tpu.dynamic_rotate %4 by %c253_i32_24 dim 1 : vector<1x256xf32>, i32 -> vector<1x256xf32>
    %c13_i32 = arith.constant 13 : i32
    %49 = vector.broadcast %c13_i32 : i32 to vector<1x256xi32>
    %50 = arith.cmpi slt, %5, %49 : vector<1x256xi32>
    %cst_25 = arith.constant 0.000000e+00 : f32
    %51 = vector.broadcast %cst_25 : f32 to vector<1x256xf32>
    %52 = arith.select %50, %47, %51 : vector<1x256xi1>, vector<1x256xf32>
    %cst_26 = arith.constant 0.000000e+00 : f32
    %53 = vector.broadcast %cst_26 : f32 to vector<1x256xf32>
    %54 = arith.select %50, %48, %53 : vector<1x256xi1>, vector<1x256xf32>
    %c0_27 = arith.constant 0 : index
    %55 = memref.load %arg1[%c0_27] : memref<98xf32, #tpu.memory_space<smem>>
    %c49 = arith.constant 49 : index
    %56 = memref.load %arg1[%c49] : memref<98xf32, #tpu.memory_space<smem>>
    %57 = vector.broadcast %55 : f32 to vector<1x256xf32>
    %58 = arith.mulf %57, %12 : vector<1x256xf32>
    %59 = vector.broadcast %56 : f32 to vector<1x256xf32>
    %60 = arith.mulf %59, %14 : vector<1x256xf32>
    %61 = arith.addf %58, %60 : vector<1x256xf32>
    %c1 = arith.constant 1 : index
    %62 = memref.load %arg1[%c1] : memref<98xf32, #tpu.memory_space<smem>>
    %c50 = arith.constant 50 : index
    %63 = memref.load %arg1[%c50] : memref<98xf32, #tpu.memory_space<smem>>
    %64 = vector.broadcast %62 : f32 to vector<1x256xf32>
    %65 = arith.mulf %64, %20 : vector<1x256xf32>
    %66 = vector.broadcast %63 : f32 to vector<1x256xf32>
    %67 = arith.mulf %66, %22 : vector<1x256xf32>
    %68 = arith.addf %65, %67 : vector<1x256xf32>
    %69 = arith.addf %61, %68 : vector<1x256xf32>
    %c2 = arith.constant 2 : index
    %70 = memref.load %arg1[%c2] : memref<98xf32, #tpu.memory_space<smem>>
    %c51 = arith.constant 51 : index
    %71 = memref.load %arg1[%c51] : memref<98xf32, #tpu.memory_space<smem>>
    %72 = vector.broadcast %70 : f32 to vector<1x256xf32>
    %73 = arith.mulf %72, %28 : vector<1x256xf32>
    %74 = vector.broadcast %71 : f32 to vector<1x256xf32>
    %75 = arith.mulf %74, %30 : vector<1x256xf32>
    %76 = arith.addf %73, %75 : vector<1x256xf32>
    %77 = arith.addf %69, %76 : vector<1x256xf32>
    %c3 = arith.constant 3 : index
    %78 = memref.load %arg1[%c3] : memref<98xf32, #tpu.memory_space<smem>>
    %c52 = arith.constant 52 : index
    %79 = memref.load %arg1[%c52] : memref<98xf32, #tpu.memory_space<smem>>
    %80 = vector.broadcast %78 : f32 to vector<1x256xf32>
    %81 = arith.mulf %80, %1 : vector<1x256xf32>
    %82 = vector.broadcast %79 : f32 to vector<1x256xf32>
    %83 = arith.mulf %82, %4 : vector<1x256xf32>
    %84 = arith.addf %81, %83 : vector<1x256xf32>
    %85 = arith.addf %77, %84 : vector<1x256xf32>
    %c4 = arith.constant 4 : index
    %86 = memref.load %arg1[%c4] : memref<98xf32, #tpu.memory_space<smem>>
    %c53 = arith.constant 53 : index
    %87 = memref.load %arg1[%c53] : memref<98xf32, #tpu.memory_space<smem>>
    %88 = vector.broadcast %86 : f32 to vector<1x256xf32>
    %89 = arith.mulf %88, %36 : vector<1x256xf32>
    %90 = vector.broadcast %87 : f32 to vector<1x256xf32>
    %91 = arith.mulf %90, %38 : vector<1x256xf32>
    %92 = arith.addf %89, %91 : vector<1x256xf32>
    %93 = arith.addf %85, %92 : vector<1x256xf32>
    %c5 = arith.constant 5 : index
    %94 = memref.load %arg1[%c5] : memref<98xf32, #tpu.memory_space<smem>>
    %c54 = arith.constant 54 : index
    %95 = memref.load %arg1[%c54] : memref<98xf32, #tpu.memory_space<smem>>
    %96 = vector.broadcast %94 : f32 to vector<1x256xf32>
    %97 = arith.mulf %96, %44 : vector<1x256xf32>
    %98 = vector.broadcast %95 : f32 to vector<1x256xf32>
    %99 = arith.mulf %98, %46 : vector<1x256xf32>
    %100 = arith.addf %97, %99 : vector<1x256xf32>
    %101 = arith.addf %93, %100 : vector<1x256xf32>
    %c6 = arith.constant 6 : index
    %102 = memref.load %arg1[%c6] : memref<98xf32, #tpu.memory_space<smem>>
    %c55 = arith.constant 55 : index
    %103 = memref.load %arg1[%c55] : memref<98xf32, #tpu.memory_space<smem>>
    %104 = vector.broadcast %102 : f32 to vector<1x256xf32>
    %105 = arith.mulf %104, %52 : vector<1x256xf32>
    %106 = vector.broadcast %103 : f32 to vector<1x256xf32>
    %107 = arith.mulf %106, %54 : vector<1x256xf32>
    %108 = arith.addf %105, %107 : vector<1x256xf32>
    %109 = arith.addf %101, %108 : vector<1x256xf32>
    %c48_i32 = arith.constant 48 : i32
    %110 = tpu.dynamic_rotate %109 by %c48_i32 dim 1 : vector<1x256xf32>, i32 -> vector<1x256xf32>
    %c48_i32_28 = arith.constant 48 : i32
    %111 = vector.broadcast %c48_i32_28 : i32 to vector<1x256xi32>
    %112 = arith.cmpi sge, %6, %111 : vector<1x256xi32>
    %cst_29 = arith.constant 0.000000e+00 : f32
    %113 = vector.broadcast %cst_29 : f32 to vector<1x256xf32>
    %114 = arith.select %112, %110, %113 : vector<1x256xi1>, vector<1x256xf32>
    %c7 = arith.constant 7 : index
    %115 = memref.load %arg1[%c7] : memref<98xf32, #tpu.memory_space<smem>>
    %c56 = arith.constant 56 : index
    %116 = memref.load %arg1[%c56] : memref<98xf32, #tpu.memory_space<smem>>
    %117 = vector.broadcast %115 : f32 to vector<1x256xf32>
    %118 = arith.mulf %117, %12 : vector<1x256xf32>
    %119 = vector.broadcast %116 : f32 to vector<1x256xf32>
    %120 = arith.mulf %119, %14 : vector<1x256xf32>
    %121 = arith.addf %118, %120 : vector<1x256xf32>
    %c8 = arith.constant 8 : index
    %122 = memref.load %arg1[%c8] : memref<98xf32, #tpu.memory_space<smem>>
    %c57 = arith.constant 57 : index
    %123 = memref.load %arg1[%c57] : memref<98xf32, #tpu.memory_space<smem>>
    %124 = vector.broadcast %122 : f32 to vector<1x256xf32>
    %125 = arith.mulf %124, %20 : vector<1x256xf32>
    %126 = vector.broadcast %123 : f32 to vector<1x256xf32>
    %127 = arith.mulf %126, %22 : vector<1x256xf32>
    %128 = arith.addf %125, %127 : vector<1x256xf32>
    %129 = arith.addf %121, %128 : vector<1x256xf32>
    %c9 = arith.constant 9 : index
    %130 = memref.load %arg1[%c9] : memref<98xf32, #tpu.memory_space<smem>>
    %c58 = arith.constant 58 : index
    %131 = memref.load %arg1[%c58] : memref<98xf32, #tpu.memory_space<smem>>
    %132 = vector.broadcast %130 : f32 to vector<1x256xf32>
    %133 = arith.mulf %132, %28 : vector<1x256xf32>
    %134 = vector.broadcast %131 : f32 to vector<1x256xf32>
    %135 = arith.mulf %134, %30 : vector<1x256xf32>
    %136 = arith.addf %133, %135 : vector<1x256xf32>
    %137 = arith.addf %129, %136 : vector<1x256xf32>
    %c10 = arith.constant 10 : index
    %138 = memref.load %arg1[%c10] : memref<98xf32, #tpu.memory_space<smem>>
    %c59 = arith.constant 59 : index
    %139 = memref.load %arg1[%c59] : memref<98xf32, #tpu.memory_space<smem>>
    %140 = vector.broadcast %138 : f32 to vector<1x256xf32>
    %141 = arith.mulf %140, %1 : vector<1x256xf32>
    %142 = vector.broadcast %139 : f32 to vector<1x256xf32>
    %143 = arith.mulf %142, %4 : vector<1x256xf32>
    %144 = arith.addf %141, %143 : vector<1x256xf32>
    %145 = arith.addf %137, %144 : vector<1x256xf32>
    %c11 = arith.constant 11 : index
    %146 = memref.load %arg1[%c11] : memref<98xf32, #tpu.memory_space<smem>>
    %c60 = arith.constant 60 : index
    %147 = memref.load %arg1[%c60] : memref<98xf32, #tpu.memory_space<smem>>
    %148 = vector.broadcast %146 : f32 to vector<1x256xf32>
    %149 = arith.mulf %148, %36 : vector<1x256xf32>
    %150 = vector.broadcast %147 : f32 to vector<1x256xf32>
    %151 = arith.mulf %150, %38 : vector<1x256xf32>
    %152 = arith.addf %149, %151 : vector<1x256xf32>
    %153 = arith.addf %145, %152 : vector<1x256xf32>
    %c12 = arith.constant 12 : index
    %154 = memref.load %arg1[%c12] : memref<98xf32, #tpu.memory_space<smem>>
    %c61 = arith.constant 61 : index
    %155 = memref.load %arg1[%c61] : memref<98xf32, #tpu.memory_space<smem>>
    %156 = vector.broadcast %154 : f32 to vector<1x256xf32>
    %157 = arith.mulf %156, %44 : vector<1x256xf32>
    %158 = vector.broadcast %155 : f32 to vector<1x256xf32>
    %159 = arith.mulf %158, %46 : vector<1x256xf32>
    %160 = arith.addf %157, %159 : vector<1x256xf32>
    %161 = arith.addf %153, %160 : vector<1x256xf32>
    %c13 = arith.constant 13 : index
    %162 = memref.load %arg1[%c13] : memref<98xf32, #tpu.memory_space<smem>>
    %c62 = arith.constant 62 : index
    %163 = memref.load %arg1[%c62] : memref<98xf32, #tpu.memory_space<smem>>
    %164 = vector.broadcast %162 : f32 to vector<1x256xf32>
    %165 = arith.mulf %164, %52 : vector<1x256xf32>
    %166 = vector.broadcast %163 : f32 to vector<1x256xf32>
    %167 = arith.mulf %166, %54 : vector<1x256xf32>
    %168 = arith.addf %165, %167 : vector<1x256xf32>
    %169 = arith.addf %161, %168 : vector<1x256xf32>
    %c32_i32 = arith.constant 32 : i32
    %170 = tpu.dynamic_rotate %169 by %c32_i32 dim 1 : vector<1x256xf32>, i32 -> vector<1x256xf32>
    %c32_i32_30 = arith.constant 32 : i32
    %171 = vector.broadcast %c32_i32_30 : i32 to vector<1x256xi32>
    %172 = arith.cmpi sge, %6, %171 : vector<1x256xi32>
    %cst_31 = arith.constant 0.000000e+00 : f32
    %173 = vector.broadcast %cst_31 : f32 to vector<1x256xf32>
    %174 = arith.select %172, %170, %173 : vector<1x256xi1>, vector<1x256xf32>
    %175 = arith.addf %114, %174 : vector<1x256xf32>
    %c14 = arith.constant 14 : index
    %176 = memref.load %arg1[%c14] : memref<98xf32, #tpu.memory_space<smem>>
    %c63 = arith.constant 63 : index
    %177 = memref.load %arg1[%c63] : memref<98xf32, #tpu.memory_space<smem>>
    %178 = vector.broadcast %176 : f32 to vector<1x256xf32>
    %179 = arith.mulf %178, %12 : vector<1x256xf32>
    %180 = vector.broadcast %177 : f32 to vector<1x256xf32>
    %181 = arith.mulf %180, %14 : vector<1x256xf32>
    %182 = arith.addf %179, %181 : vector<1x256xf32>
    %c15 = arith.constant 15 : index
    %183 = memref.load %arg1[%c15] : memref<98xf32, #tpu.memory_space<smem>>
    %c64 = arith.constant 64 : index
    %184 = memref.load %arg1[%c64] : memref<98xf32, #tpu.memory_space<smem>>
    %185 = vector.broadcast %183 : f32 to vector<1x256xf32>
    %186 = arith.mulf %185, %20 : vector<1x256xf32>
    %187 = vector.broadcast %184 : f32 to vector<1x256xf32>
    %188 = arith.mulf %187, %22 : vector<1x256xf32>
    %189 = arith.addf %186, %188 : vector<1x256xf32>
    %190 = arith.addf %182, %189 : vector<1x256xf32>
    %c16 = arith.constant 16 : index
    %191 = memref.load %arg1[%c16] : memref<98xf32, #tpu.memory_space<smem>>
    %c65 = arith.constant 65 : index
    %192 = memref.load %arg1[%c65] : memref<98xf32, #tpu.memory_space<smem>>
    %193 = vector.broadcast %191 : f32 to vector<1x256xf32>
    %194 = arith.mulf %193, %28 : vector<1x256xf32>
    %195 = vector.broadcast %192 : f32 to vector<1x256xf32>
    %196 = arith.mulf %195, %30 : vector<1x256xf32>
    %197 = arith.addf %194, %196 : vector<1x256xf32>
    %198 = arith.addf %190, %197 : vector<1x256xf32>
    %c17 = arith.constant 17 : index
    %199 = memref.load %arg1[%c17] : memref<98xf32, #tpu.memory_space<smem>>
    %c66 = arith.constant 66 : index
    %200 = memref.load %arg1[%c66] : memref<98xf32, #tpu.memory_space<smem>>
    %201 = vector.broadcast %199 : f32 to vector<1x256xf32>
    %202 = arith.mulf %201, %1 : vector<1x256xf32>
    %203 = vector.broadcast %200 : f32 to vector<1x256xf32>
    %204 = arith.mulf %203, %4 : vector<1x256xf32>
    %205 = arith.addf %202, %204 : vector<1x256xf32>
    %206 = arith.addf %198, %205 : vector<1x256xf32>
    %c18 = arith.constant 18 : index
    %207 = memref.load %arg1[%c18] : memref<98xf32, #tpu.memory_space<smem>>
    %c67 = arith.constant 67 : index
    %208 = memref.load %arg1[%c67] : memref<98xf32, #tpu.memory_space<smem>>
    %209 = vector.broadcast %207 : f32 to vector<1x256xf32>
    %210 = arith.mulf %209, %36 : vector<1x256xf32>
    %211 = vector.broadcast %208 : f32 to vector<1x256xf32>
    %212 = arith.mulf %211, %38 : vector<1x256xf32>
    %213 = arith.addf %210, %212 : vector<1x256xf32>
    %214 = arith.addf %206, %213 : vector<1x256xf32>
    %c19 = arith.constant 19 : index
    %215 = memref.load %arg1[%c19] : memref<98xf32, #tpu.memory_space<smem>>
    %c68 = arith.constant 68 : index
    %216 = memref.load %arg1[%c68] : memref<98xf32, #tpu.memory_space<smem>>
    %217 = vector.broadcast %215 : f32 to vector<1x256xf32>
    %218 = arith.mulf %217, %44 : vector<1x256xf32>
    %219 = vector.broadcast %216 : f32 to vector<1x256xf32>
    %220 = arith.mulf %219, %46 : vector<1x256xf32>
    %221 = arith.addf %218, %220 : vector<1x256xf32>
    %222 = arith.addf %214, %221 : vector<1x256xf32>
    %c20 = arith.constant 20 : index
    %223 = memref.load %arg1[%c20] : memref<98xf32, #tpu.memory_space<smem>>
    %c69 = arith.constant 69 : index
    %224 = memref.load %arg1[%c69] : memref<98xf32, #tpu.memory_space<smem>>
    %225 = vector.broadcast %223 : f32 to vector<1x256xf32>
    %226 = arith.mulf %225, %52 : vector<1x256xf32>
    %227 = vector.broadcast %224 : f32 to vector<1x256xf32>
    %228 = arith.mulf %227, %54 : vector<1x256xf32>
    %229 = arith.addf %226, %228 : vector<1x256xf32>
    %230 = arith.addf %222, %229 : vector<1x256xf32>
    %c16_i32 = arith.constant 16 : i32
    %231 = tpu.dynamic_rotate %230 by %c16_i32 dim 1 : vector<1x256xf32>, i32 -> vector<1x256xf32>
    %c16_i32_32 = arith.constant 16 : i32
    %232 = vector.broadcast %c16_i32_32 : i32 to vector<1x256xi32>
    %233 = arith.cmpi sge, %6, %232 : vector<1x256xi32>
    %cst_33 = arith.constant 0.000000e+00 : f32
    %234 = vector.broadcast %cst_33 : f32 to vector<1x256xf32>
    %235 = arith.select %233, %231, %234 : vector<1x256xi1>, vector<1x256xf32>
    %236 = arith.addf %175, %235 : vector<1x256xf32>
    %c21 = arith.constant 21 : index
    %237 = memref.load %arg1[%c21] : memref<98xf32, #tpu.memory_space<smem>>
    %c70 = arith.constant 70 : index
    %238 = memref.load %arg1[%c70] : memref<98xf32, #tpu.memory_space<smem>>
    %239 = vector.broadcast %237 : f32 to vector<1x256xf32>
    %240 = arith.mulf %239, %12 : vector<1x256xf32>
    %241 = vector.broadcast %238 : f32 to vector<1x256xf32>
    %242 = arith.mulf %241, %14 : vector<1x256xf32>
    %243 = arith.addf %240, %242 : vector<1x256xf32>
    %c22 = arith.constant 22 : index
    %244 = memref.load %arg1[%c22] : memref<98xf32, #tpu.memory_space<smem>>
    %c71 = arith.constant 71 : index
    %245 = memref.load %arg1[%c71] : memref<98xf32, #tpu.memory_space<smem>>
    %246 = vector.broadcast %244 : f32 to vector<1x256xf32>
    %247 = arith.mulf %246, %20 : vector<1x256xf32>
    %248 = vector.broadcast %245 : f32 to vector<1x256xf32>
    %249 = arith.mulf %248, %22 : vector<1x256xf32>
    %250 = arith.addf %247, %249 : vector<1x256xf32>
    %251 = arith.addf %243, %250 : vector<1x256xf32>
    %c23 = arith.constant 23 : index
    %252 = memref.load %arg1[%c23] : memref<98xf32, #tpu.memory_space<smem>>
    %c72 = arith.constant 72 : index
    %253 = memref.load %arg1[%c72] : memref<98xf32, #tpu.memory_space<smem>>
    %254 = vector.broadcast %252 : f32 to vector<1x256xf32>
    %255 = arith.mulf %254, %28 : vector<1x256xf32>
    %256 = vector.broadcast %253 : f32 to vector<1x256xf32>
    %257 = arith.mulf %256, %30 : vector<1x256xf32>
    %258 = arith.addf %255, %257 : vector<1x256xf32>
    %259 = arith.addf %251, %258 : vector<1x256xf32>
    %c24 = arith.constant 24 : index
    %260 = memref.load %arg1[%c24] : memref<98xf32, #tpu.memory_space<smem>>
    %c73 = arith.constant 73 : index
    %261 = memref.load %arg1[%c73] : memref<98xf32, #tpu.memory_space<smem>>
    %262 = vector.broadcast %260 : f32 to vector<1x256xf32>
    %263 = arith.mulf %262, %1 : vector<1x256xf32>
    %264 = vector.broadcast %261 : f32 to vector<1x256xf32>
    %265 = arith.mulf %264, %4 : vector<1x256xf32>
    %266 = arith.addf %263, %265 : vector<1x256xf32>
    %267 = arith.addf %259, %266 : vector<1x256xf32>
    %c25 = arith.constant 25 : index
    %268 = memref.load %arg1[%c25] : memref<98xf32, #tpu.memory_space<smem>>
    %c74 = arith.constant 74 : index
    %269 = memref.load %arg1[%c74] : memref<98xf32, #tpu.memory_space<smem>>
    %270 = vector.broadcast %268 : f32 to vector<1x256xf32>
    %271 = arith.mulf %270, %36 : vector<1x256xf32>
    %272 = vector.broadcast %269 : f32 to vector<1x256xf32>
    %273 = arith.mulf %272, %38 : vector<1x256xf32>
    %274 = arith.addf %271, %273 : vector<1x256xf32>
    %275 = arith.addf %267, %274 : vector<1x256xf32>
    %c26 = arith.constant 26 : index
    %276 = memref.load %arg1[%c26] : memref<98xf32, #tpu.memory_space<smem>>
    %c75 = arith.constant 75 : index
    %277 = memref.load %arg1[%c75] : memref<98xf32, #tpu.memory_space<smem>>
    %278 = vector.broadcast %276 : f32 to vector<1x256xf32>
    %279 = arith.mulf %278, %44 : vector<1x256xf32>
    %280 = vector.broadcast %277 : f32 to vector<1x256xf32>
    %281 = arith.mulf %280, %46 : vector<1x256xf32>
    %282 = arith.addf %279, %281 : vector<1x256xf32>
    %283 = arith.addf %275, %282 : vector<1x256xf32>
    %c27 = arith.constant 27 : index
    %284 = memref.load %arg1[%c27] : memref<98xf32, #tpu.memory_space<smem>>
    %c76 = arith.constant 76 : index
    %285 = memref.load %arg1[%c76] : memref<98xf32, #tpu.memory_space<smem>>
    %286 = vector.broadcast %284 : f32 to vector<1x256xf32>
    %287 = arith.mulf %286, %52 : vector<1x256xf32>
    %288 = vector.broadcast %285 : f32 to vector<1x256xf32>
    %289 = arith.mulf %288, %54 : vector<1x256xf32>
    %290 = arith.addf %287, %289 : vector<1x256xf32>
    %291 = arith.addf %283, %290 : vector<1x256xf32>
    %292 = arith.addf %236, %291 : vector<1x256xf32>
    %c28 = arith.constant 28 : index
    %293 = memref.load %arg1[%c28] : memref<98xf32, #tpu.memory_space<smem>>
    %c77 = arith.constant 77 : index
    %294 = memref.load %arg1[%c77] : memref<98xf32, #tpu.memory_space<smem>>
    %295 = vector.broadcast %293 : f32 to vector<1x256xf32>
    %296 = arith.mulf %295, %12 : vector<1x256xf32>
    %297 = vector.broadcast %294 : f32 to vector<1x256xf32>
    %298 = arith.mulf %297, %14 : vector<1x256xf32>
    %299 = arith.addf %296, %298 : vector<1x256xf32>
    %c29 = arith.constant 29 : index
    %300 = memref.load %arg1[%c29] : memref<98xf32, #tpu.memory_space<smem>>
    %c78 = arith.constant 78 : index
    %301 = memref.load %arg1[%c78] : memref<98xf32, #tpu.memory_space<smem>>
    %302 = vector.broadcast %300 : f32 to vector<1x256xf32>
    %303 = arith.mulf %302, %20 : vector<1x256xf32>
    %304 = vector.broadcast %301 : f32 to vector<1x256xf32>
    %305 = arith.mulf %304, %22 : vector<1x256xf32>
    %306 = arith.addf %303, %305 : vector<1x256xf32>
    %307 = arith.addf %299, %306 : vector<1x256xf32>
    %c30 = arith.constant 30 : index
    %308 = memref.load %arg1[%c30] : memref<98xf32, #tpu.memory_space<smem>>
    %c79 = arith.constant 79 : index
    %309 = memref.load %arg1[%c79] : memref<98xf32, #tpu.memory_space<smem>>
    %310 = vector.broadcast %308 : f32 to vector<1x256xf32>
    %311 = arith.mulf %310, %28 : vector<1x256xf32>
    %312 = vector.broadcast %309 : f32 to vector<1x256xf32>
    %313 = arith.mulf %312, %30 : vector<1x256xf32>
    %314 = arith.addf %311, %313 : vector<1x256xf32>
    %315 = arith.addf %307, %314 : vector<1x256xf32>
    %c31 = arith.constant 31 : index
    %316 = memref.load %arg1[%c31] : memref<98xf32, #tpu.memory_space<smem>>
    %c80 = arith.constant 80 : index
    %317 = memref.load %arg1[%c80] : memref<98xf32, #tpu.memory_space<smem>>
    %318 = vector.broadcast %316 : f32 to vector<1x256xf32>
    %319 = arith.mulf %318, %1 : vector<1x256xf32>
    %320 = vector.broadcast %317 : f32 to vector<1x256xf32>
    %321 = arith.mulf %320, %4 : vector<1x256xf32>
    %322 = arith.addf %319, %321 : vector<1x256xf32>
    %323 = arith.addf %315, %322 : vector<1x256xf32>
    %c32 = arith.constant 32 : index
    %324 = memref.load %arg1[%c32] : memref<98xf32, #tpu.memory_space<smem>>
    %c81 = arith.constant 81 : index
    %325 = memref.load %arg1[%c81] : memref<98xf32, #tpu.memory_space<smem>>
    %326 = vector.broadcast %324 : f32 to vector<1x256xf32>
    %327 = arith.mulf %326, %36 : vector<1x256xf32>
    %328 = vector.broadcast %325 : f32 to vector<1x256xf32>
    %329 = arith.mulf %328, %38 : vector<1x256xf32>
    %330 = arith.addf %327, %329 : vector<1x256xf32>
    %331 = arith.addf %323, %330 : vector<1x256xf32>
    %c33 = arith.constant 33 : index
    %332 = memref.load %arg1[%c33] : memref<98xf32, #tpu.memory_space<smem>>
    %c82 = arith.constant 82 : index
    %333 = memref.load %arg1[%c82] : memref<98xf32, #tpu.memory_space<smem>>
    %334 = vector.broadcast %332 : f32 to vector<1x256xf32>
    %335 = arith.mulf %334, %44 : vector<1x256xf32>
    %336 = vector.broadcast %333 : f32 to vector<1x256xf32>
    %337 = arith.mulf %336, %46 : vector<1x256xf32>
    %338 = arith.addf %335, %337 : vector<1x256xf32>
    %339 = arith.addf %331, %338 : vector<1x256xf32>
    %c34 = arith.constant 34 : index
    %340 = memref.load %arg1[%c34] : memref<98xf32, #tpu.memory_space<smem>>
    %c83 = arith.constant 83 : index
    %341 = memref.load %arg1[%c83] : memref<98xf32, #tpu.memory_space<smem>>
    %342 = vector.broadcast %340 : f32 to vector<1x256xf32>
    %343 = arith.mulf %342, %52 : vector<1x256xf32>
    %344 = vector.broadcast %341 : f32 to vector<1x256xf32>
    %345 = arith.mulf %344, %54 : vector<1x256xf32>
    %346 = arith.addf %343, %345 : vector<1x256xf32>
    %347 = arith.addf %339, %346 : vector<1x256xf32>
    %c240_i32 = arith.constant 240 : i32
    %348 = tpu.dynamic_rotate %347 by %c240_i32 dim 1 : vector<1x256xf32>, i32 -> vector<1x256xf32>
    %c240_i32_34 = arith.constant 240 : i32
    %349 = vector.broadcast %c240_i32_34 : i32 to vector<1x256xi32>
    %350 = arith.cmpi slt, %6, %349 : vector<1x256xi32>
    %cst_35 = arith.constant 0.000000e+00 : f32
    %351 = vector.broadcast %cst_35 : f32 to vector<1x256xf32>
    %352 = arith.select %350, %348, %351 : vector<1x256xi1>, vector<1x256xf32>
    %353 = arith.addf %292, %352 : vector<1x256xf32>
    %c35 = arith.constant 35 : index
    %354 = memref.load %arg1[%c35] : memref<98xf32, #tpu.memory_space<smem>>
    %c84 = arith.constant 84 : index
    %355 = memref.load %arg1[%c84] : memref<98xf32, #tpu.memory_space<smem>>
    %356 = vector.broadcast %354 : f32 to vector<1x256xf32>
    %357 = arith.mulf %356, %12 : vector<1x256xf32>
    %358 = vector.broadcast %355 : f32 to vector<1x256xf32>
    %359 = arith.mulf %358, %14 : vector<1x256xf32>
    %360 = arith.addf %357, %359 : vector<1x256xf32>
    %c36 = arith.constant 36 : index
    %361 = memref.load %arg1[%c36] : memref<98xf32, #tpu.memory_space<smem>>
    %c85 = arith.constant 85 : index
    %362 = memref.load %arg1[%c85] : memref<98xf32, #tpu.memory_space<smem>>
    %363 = vector.broadcast %361 : f32 to vector<1x256xf32>
    %364 = arith.mulf %363, %20 : vector<1x256xf32>
    %365 = vector.broadcast %362 : f32 to vector<1x256xf32>
    %366 = arith.mulf %365, %22 : vector<1x256xf32>
    %367 = arith.addf %364, %366 : vector<1x256xf32>
    %368 = arith.addf %360, %367 : vector<1x256xf32>
    %c37 = arith.constant 37 : index
    %369 = memref.load %arg1[%c37] : memref<98xf32, #tpu.memory_space<smem>>
    %c86 = arith.constant 86 : index
    %370 = memref.load %arg1[%c86] : memref<98xf32, #tpu.memory_space<smem>>
    %371 = vector.broadcast %369 : f32 to vector<1x256xf32>
    %372 = arith.mulf %371, %28 : vector<1x256xf32>
    %373 = vector.broadcast %370 : f32 to vector<1x256xf32>
    %374 = arith.mulf %373, %30 : vector<1x256xf32>
    %375 = arith.addf %372, %374 : vector<1x256xf32>
    %376 = arith.addf %368, %375 : vector<1x256xf32>
    %c38 = arith.constant 38 : index
    %377 = memref.load %arg1[%c38] : memref<98xf32, #tpu.memory_space<smem>>
    %c87 = arith.constant 87 : index
    %378 = memref.load %arg1[%c87] : memref<98xf32, #tpu.memory_space<smem>>
    %379 = vector.broadcast %377 : f32 to vector<1x256xf32>
    %380 = arith.mulf %379, %1 : vector<1x256xf32>
    %381 = vector.broadcast %378 : f32 to vector<1x256xf32>
    %382 = arith.mulf %381, %4 : vector<1x256xf32>
    %383 = arith.addf %380, %382 : vector<1x256xf32>
    %384 = arith.addf %376, %383 : vector<1x256xf32>
    %c39 = arith.constant 39 : index
    %385 = memref.load %arg1[%c39] : memref<98xf32, #tpu.memory_space<smem>>
    %c88 = arith.constant 88 : index
    %386 = memref.load %arg1[%c88] : memref<98xf32, #tpu.memory_space<smem>>
    %387 = vector.broadcast %385 : f32 to vector<1x256xf32>
    %388 = arith.mulf %387, %36 : vector<1x256xf32>
    %389 = vector.broadcast %386 : f32 to vector<1x256xf32>
    %390 = arith.mulf %389, %38 : vector<1x256xf32>
    %391 = arith.addf %388, %390 : vector<1x256xf32>
    %392 = arith.addf %384, %391 : vector<1x256xf32>
    %c40 = arith.constant 40 : index
    %393 = memref.load %arg1[%c40] : memref<98xf32, #tpu.memory_space<smem>>
    %c89 = arith.constant 89 : index
    %394 = memref.load %arg1[%c89] : memref<98xf32, #tpu.memory_space<smem>>
    %395 = vector.broadcast %393 : f32 to vector<1x256xf32>
    %396 = arith.mulf %395, %44 : vector<1x256xf32>
    %397 = vector.broadcast %394 : f32 to vector<1x256xf32>
    %398 = arith.mulf %397, %46 : vector<1x256xf32>
    %399 = arith.addf %396, %398 : vector<1x256xf32>
    %400 = arith.addf %392, %399 : vector<1x256xf32>
    %c41 = arith.constant 41 : index
    %401 = memref.load %arg1[%c41] : memref<98xf32, #tpu.memory_space<smem>>
    %c90 = arith.constant 90 : index
    %402 = memref.load %arg1[%c90] : memref<98xf32, #tpu.memory_space<smem>>
    %403 = vector.broadcast %401 : f32 to vector<1x256xf32>
    %404 = arith.mulf %403, %52 : vector<1x256xf32>
    %405 = vector.broadcast %402 : f32 to vector<1x256xf32>
    %406 = arith.mulf %405, %54 : vector<1x256xf32>
    %407 = arith.addf %404, %406 : vector<1x256xf32>
    %408 = arith.addf %400, %407 : vector<1x256xf32>
    %c224_i32 = arith.constant 224 : i32
    %409 = tpu.dynamic_rotate %408 by %c224_i32 dim 1 : vector<1x256xf32>, i32 -> vector<1x256xf32>
    %c224_i32_36 = arith.constant 224 : i32
    %410 = vector.broadcast %c224_i32_36 : i32 to vector<1x256xi32>
    %411 = arith.cmpi slt, %6, %410 : vector<1x256xi32>
    %cst_37 = arith.constant 0.000000e+00 : f32
    %412 = vector.broadcast %cst_37 : f32 to vector<1x256xf32>
    %413 = arith.select %411, %409, %412 : vector<1x256xi1>, vector<1x256xf32>
    %414 = arith.addf %353, %413 : vector<1x256xf32>
    %c42 = arith.constant 42 : index
    %415 = memref.load %arg1[%c42] : memref<98xf32, #tpu.memory_space<smem>>
    %c91 = arith.constant 91 : index
    %416 = memref.load %arg1[%c91] : memref<98xf32, #tpu.memory_space<smem>>
    %417 = vector.broadcast %415 : f32 to vector<1x256xf32>
    %418 = arith.mulf %417, %12 : vector<1x256xf32>
    %419 = vector.broadcast %416 : f32 to vector<1x256xf32>
    %420 = arith.mulf %419, %14 : vector<1x256xf32>
    %421 = arith.addf %418, %420 : vector<1x256xf32>
    %c43 = arith.constant 43 : index
    %422 = memref.load %arg1[%c43] : memref<98xf32, #tpu.memory_space<smem>>
    %c92 = arith.constant 92 : index
    %423 = memref.load %arg1[%c92] : memref<98xf32, #tpu.memory_space<smem>>
    %424 = vector.broadcast %422 : f32 to vector<1x256xf32>
    %425 = arith.mulf %424, %20 : vector<1x256xf32>
    %426 = vector.broadcast %423 : f32 to vector<1x256xf32>
    %427 = arith.mulf %426, %22 : vector<1x256xf32>
    %428 = arith.addf %425, %427 : vector<1x256xf32>
    %429 = arith.addf %421, %428 : vector<1x256xf32>
    %c44 = arith.constant 44 : index
    %430 = memref.load %arg1[%c44] : memref<98xf32, #tpu.memory_space<smem>>
    %c93 = arith.constant 93 : index
    %431 = memref.load %arg1[%c93] : memref<98xf32, #tpu.memory_space<smem>>
    %432 = vector.broadcast %430 : f32 to vector<1x256xf32>
    %433 = arith.mulf %432, %28 : vector<1x256xf32>
    %434 = vector.broadcast %431 : f32 to vector<1x256xf32>
    %435 = arith.mulf %434, %30 : vector<1x256xf32>
    %436 = arith.addf %433, %435 : vector<1x256xf32>
    %437 = arith.addf %429, %436 : vector<1x256xf32>
    %c45 = arith.constant 45 : index
    %438 = memref.load %arg1[%c45] : memref<98xf32, #tpu.memory_space<smem>>
    %c94 = arith.constant 94 : index
    %439 = memref.load %arg1[%c94] : memref<98xf32, #tpu.memory_space<smem>>
    %440 = vector.broadcast %438 : f32 to vector<1x256xf32>
    %441 = arith.mulf %440, %1 : vector<1x256xf32>
    %442 = vector.broadcast %439 : f32 to vector<1x256xf32>
    %443 = arith.mulf %442, %4 : vector<1x256xf32>
    %444 = arith.addf %441, %443 : vector<1x256xf32>
    %445 = arith.addf %437, %444 : vector<1x256xf32>
    %c46 = arith.constant 46 : index
    %446 = memref.load %arg1[%c46] : memref<98xf32, #tpu.memory_space<smem>>
    %c95 = arith.constant 95 : index
    %447 = memref.load %arg1[%c95] : memref<98xf32, #tpu.memory_space<smem>>
    %448 = vector.broadcast %446 : f32 to vector<1x256xf32>
    %449 = arith.mulf %448, %36 : vector<1x256xf32>
    %450 = vector.broadcast %447 : f32 to vector<1x256xf32>
    %451 = arith.mulf %450, %38 : vector<1x256xf32>
    %452 = arith.addf %449, %451 : vector<1x256xf32>
    %453 = arith.addf %445, %452 : vector<1x256xf32>
    %c47 = arith.constant 47 : index
    %454 = memref.load %arg1[%c47] : memref<98xf32, #tpu.memory_space<smem>>
    %c96 = arith.constant 96 : index
    %455 = memref.load %arg1[%c96] : memref<98xf32, #tpu.memory_space<smem>>
    %456 = vector.broadcast %454 : f32 to vector<1x256xf32>
    %457 = arith.mulf %456, %44 : vector<1x256xf32>
    %458 = vector.broadcast %455 : f32 to vector<1x256xf32>
    %459 = arith.mulf %458, %46 : vector<1x256xf32>
    %460 = arith.addf %457, %459 : vector<1x256xf32>
    %461 = arith.addf %453, %460 : vector<1x256xf32>
    %c48 = arith.constant 48 : index
    %462 = memref.load %arg1[%c48] : memref<98xf32, #tpu.memory_space<smem>>
    %c97 = arith.constant 97 : index
    %463 = memref.load %arg1[%c97] : memref<98xf32, #tpu.memory_space<smem>>
    %464 = vector.broadcast %462 : f32 to vector<1x256xf32>
    %465 = arith.mulf %464, %52 : vector<1x256xf32>
    %466 = vector.broadcast %463 : f32 to vector<1x256xf32>
    %467 = arith.mulf %466, %54 : vector<1x256xf32>
    %468 = arith.addf %465, %467 : vector<1x256xf32>
    %469 = arith.addf %461, %468 : vector<1x256xf32>
    %c208_i32 = arith.constant 208 : i32
    %470 = tpu.dynamic_rotate %469 by %c208_i32 dim 1 : vector<1x256xf32>, i32 -> vector<1x256xf32>
    %c208_i32_38 = arith.constant 208 : i32
    %471 = vector.broadcast %c208_i32_38 : i32 to vector<1x256xi32>
    %472 = arith.cmpi slt, %6, %471 : vector<1x256xi32>
    %cst_39 = arith.constant 0.000000e+00 : f32
    %473 = vector.broadcast %cst_39 : f32 to vector<1x256xf32>
    %474 = arith.select %472, %470, %473 : vector<1x256xi1>, vector<1x256xf32>
    %475 = arith.addf %414, %474 : vector<1x256xf32>
    %c0_40 = arith.constant 0 : index
    %476 = memref.load %arg2[%c0_40] : memref<1xf32, #tpu.memory_space<smem>>
    %477 = vector.broadcast %476 : f32 to vector<1x256xf32>
    %478 = arith.addf %475, %477 : vector<1x256xf32>
    %479 = arith.negf %478 : vector<1x256xf32>
    %480 = math.exp %479 : vector<1x256xf32>
    %cst_41 = arith.constant 1.000000e+00 : f32
    %481 = vector.broadcast %cst_41 : f32 to vector<1x256xf32>
    %482 = arith.addf %481, %480 : vector<1x256xf32>
    %483 = arith.divf %481, %482 : vector<1x256xf32>
    %484 = vector.shape_cast %483 : vector<1x256xf32> to vector<1x1x256xf32>
    %485 = vector.broadcast %484 : vector<1x1x256xf32> to vector<1x4x256xf32>
    %486 = arith.mulf %0, %485 : vector<1x4x256xf32>
    %c0_42 = arith.constant 0 : index
    %c0_43 = arith.constant 0 : index
    %c0_44 = arith.constant 0 : index
    %487 = vector.load %arg5[%c0_42, %c0_43, %c0_44] : memref<1x4x256xf32, #tpu.memory_space<vmem>>, vector<1x4x256xf32>
    tpu.vector_store %arg5[%c0_42, %c0_43, %c0_44], %486 {strides = array<i32>} : memref<1x4x256xf32, #tpu.memory_space<vmem>>, vector<1x4x256xf32>,
    return
  }
  func.func @transform_0(%arg0: i32) -> i32 {
    %c0_i32 = arith.constant 0 : i32
    %c0_i32_0 = arith.constant 0 : i32
    return %c0_i32 : i32
  }
  func.func @transform_1(%arg0: i32) -> i32 {
    %c0_i32 = arith.constant 0 : i32
    %c0_i32_0 = arith.constant 0 : i32
    return %c0_i32 : i32
  }
  func.func @transform_2(%arg0: i32) -> (i32, i32) {
    %c0_i32 = arith.constant 0 : i32
    %c0_i32_0 = arith.constant 0 : i32
    %c0_i32_1 = arith.constant 0 : i32
    return %c0_i32, %c0_i32_0 : i32, i32
  }
  func.func @transform_3(%arg0: i32) -> (i32, i32, i32) {
    %c0_i32 = arith.constant 0 : i32
    %c0_i32_0 = arith.constant 0 : i32
    %c0_i32_1 = arith.constant 0 : i32
    return %arg0, %c0_i32, %c0_i32_0 : i32, i32, i32
  }
  func.func @transform_4(%arg0: i32) -> (i32, i32, i32) {
    %c0_i32 = arith.constant 0 : i32
    %c0_i32_0 = arith.constant 0 : i32
    %c0_i32_1 = arith.constant 0 : i32
    return %arg0, %c0_i32, %c0_i32_0 : i32, i32, i32
  }
}

</mosaic_0001>

<llo_original>
// kernel: tpu_custom_call.1
$region0: #{tpu_custom_call.1}
  #allocation0 [shape = 'u32[]', space=smem, size = 0x4, offset = 0x4, fixed_abs, tag = 'smem constant byte address 0x4 - core index']
  #allocation1 [shape = 'u32[72,128]{1,0:T(1,128)}', space=vmem, size = 0x9000, scoped, tag = 'internal scratch']
  #allocation2 [shape = 'f32[1]{0:T(128)S(6)}', space=smem, size = 0x200, scoped, tag = 'scoped memory for tpu_custom_call.1']
  %s0 = inlined_call_operand.hbm [shape: f32[98], index: 0, kind: input, shape index: {}]
  %s1 = inlined_call_operand.<no memory space> [shape: f32[1], index: 1, kind: input, shape index: {}]
  %s2 = inlined_call_operand.vmem [shape: s32[1,256], index: 2, kind: input, shape index: {}]
  %s3 = inlined_call_operand.hbm [shape: f32[2,4,256], index: 3, kind: input, shape index: {}]
  %s4 = inlined_call_operand.hbm [shape: f32[2,4,256], index: 4, kind: output, shape index: {}]
  %s5 = sld [smem:[#allocation0]]
  $region57: #{tpu_custom_call.1} parent=0
    _
  %s7 = ssub.s32 1, %s5
  %s8 = scalar_select 0, %s7, %s5
  %9 = sst [smem:[#allocation2]] %s1
  $region1: #{tpu_custom_call.1} parent=0
    #allocation3 [shape = 'u8[512]{0}', space=smem, size = 0x200, scoped, tag = 'input window, operand 0, single buffered']
    #allocation4 [shape = 's32[2]{0}', space=sflag, size = 0x8, scoped, tag = 'scoped memory for tpu_custom_call.1']
    #allocation5 [shape = 's32[2]{0}', space=sflag, size = 0x8, scoped, tag = 'scoped memory for tpu_custom_call.1']
    #allocation6 [shape = 's32[2]{0}', space=sflag, size = 0x8, scoped, tag = 'scoped memory for tpu_custom_call.1']
    #allocation7 [shape = 'u8[8192]{0}', space=vmem, size = 0x2000, scoped, tag = 'input window, operand 3']
    #allocation8 [shape = 'u8[8192]{0}', space=vmem, size = 0x2000, scoped, tag = 'output window, operand 0']
    %10 = vsyncpa [#allocation6], 0
    %11 = vsyncpa [#allocation4], 0
    %s12 = scalar_lea.sflag [#allocation4], 1
    %13 = vsyncpa %s12, 0
    %14 = vsyncpa [#allocation5], 0
    %s15 = scalar_lea.sflag [#allocation5], 1
    %16 = vsyncpa %s15, 0
    loop: start=0, step=1, limit=4
    $region2: #{tpu_custom_call.1} parent=1 // loop_pre_header
      _
    $region3: #{tpu_custom_call.1} parent=1 // loop_header
      %s18 = sphi 0, %s22
      %p19 = scmp.ge.s32.totalorder %s18, 4
      %s26 = sphi 0, %s26
      %s28 = sphi 0, %s26
      %s29 = sphi 0, %s28
      %s43 = sphi 0, %s29
      %s47 = sphi 0, %s47
      %s49 = sphi 0, %s47
      %s50 = sphi 0, %s49
      %s64 = sphi 0, %s50
      %s68 = sphi 0, %s68
      %s70 = sphi 0, %s68
      %s71 = sphi 0, %s70
      %s85 = sphi 0, %s71
      %s91 = sphi 0, %s93
      %s94 = sphi 0, %s91
      %s95 = sphi 0, %s94
      %s111 = sphi 0, %s95
      %s117 = sphi 0, %s119
      %s120 = sphi 0, %s117
      %s121 = sphi 0, %s120
      %s137 = sphi 0, %s121
    $region4: #{tpu_custom_call.1} parent=1 // loop_header_branch
      %21 = sbr.rel (%p19) target = $region8
    $region5: #{tpu_custom_call.1} parent=1 // loop_body
      %s23 = ssub.s32 %s18, 1
      %s24 = ssub.s32 %s18, 2
      %s25 = sadd.s32 %s18, 1
      %s27 = sadd.s32 %s26, 1
      %p30 = scmp.eq.s32.totalorder %s18, 1
      %p31 = scmp.ne.s32.totalorder %s26, %s28
      %p32 = scmp.eq.s32.totalorder %s18, 0
      %p33 = por %p31, %p32
      %p34 = scmp.ne.s32.totalorder %s26, %s28
      %p35 = scmp.eq.s32.totalorder %s23, 1
      %p36 = por %p34, %p35
      %p37 = scmp.ne.s32.totalorder %s28, %s29
      %p38 = scmp.eq.s32.totalorder %s23, 0
      %p39 = por %p37, %p38
      %p40 = scmp.ne.s32.totalorder %s28, %s29
      %p41 = scmp.eq.s32.totalorder %s24, 1
      %p42 = por %p40, %p41
      %p44 = scmp.ne.s32.totalorder %s29, %s43
      %p45 = scmp.eq.s32.totalorder %s24, 0
      %p46 = por %p44, %p45
      %s48 = sadd.s32 %s47, 1
      %p51 = scmp.eq.s32.totalorder %s18, 1
      %p52 = scmp.ne.s32.totalorder %s47, %s49
      %p53 = scmp.eq.s32.totalorder %s18, 0
      %p54 = por %p52, %p53
      %p55 = scmp.ne.s32.totalorder %s47, %s49
      %p56 = scmp.eq.s32.totalorder %s23, 1
      %p57 = por %p55, %p56
      %p58 = scmp.ne.s32.totalorder %s49, %s50
      %p59 = scmp.eq.s32.totalorder %s23, 0
      %p60 = por %p58, %p59
      %p61 = scmp.ne.s32.totalorder %s49, %s50
      %p62 = scmp.eq.s32.totalorder %s24, 1
      %p63 = por %p61, %p62
      %p65 = scmp.ne.s32.totalorder %s50, %s64
      %p66 = scmp.eq.s32.totalorder %s24, 0
      %p67 = por %p65, %p66
      %s69 = sadd.s32 %s68, 1
      %p72 = scmp.eq.s32.totalorder %s18, 1
      %p73 = scmp.ne.s32.totalorder %s68, %s70
      %p74 = scmp.eq.s32.totalorder %s18, 0
      %p75 = por %p73, %p74
      %p76 = scmp.ne.s32.totalorder %s68, %s70
      %p77 = scmp.eq.s32.totalorder %s23, 1
      %p78 = por %p76, %p77
      %p79 = scmp.ne.s32.totalorder %s70, %s71
      %p80 = scmp.eq.s32.totalorder %s23, 0
      %p81 = por %p79, %p80
      %p82 = scmp.ne.s32.totalorder %s70, %s71
      %p83 = scmp.eq.s32.totalorder %s24, 1
      %p84 = por %p82, %p83
      %p86 = scmp.ne.s32.totalorder %s71, %s85
      %p87 = scmp.eq.s32.totalorder %s24, 0
      %p88 = por %p86, %p87
      %s89 = ssub.s32 %s18, %s25
      %p90 = scmp.eq.s32.totalorder %s89, 0
      %s92 = sadd.s32 %s91, 1
      %s93 = scalar_select %p90, %s91, %s92
      %p96 = pneg %p90
      %p97 = scmp.eq.s32.totalorder %s18, 1
      %p98 = por %p96, %p97
      %p99 = scmp.ne.s32.totalorder %s91, %s94
      %p100 = scmp.eq.s32.totalorder %s18, 0
      %p101 = por %p99, %p100
      %p102 = scmp.ne.s32.totalorder %s91, %s94
      %p103 = scmp.eq.s32.totalorder %s23, 1
      %p104 = por %p102, %p103
      %p105 = scmp.ne.s32.totalorder %s94, %s95
      %p106 = scmp.eq.s32.totalorder %s23, 0
      %p107 = por %p105, %p106
      %p108 = scmp.ne.s32.totalorder %s94, %s95
      %p109 = scmp.eq.s32.totalorder %s24, 1
      %p110 = por %p108, %p109
      %p112 = scmp.ne.s32.totalorder %s95, %s111
      %p113 = scmp.eq.s32.totalorder %s24, 0
      %p114 = por %p112, %p113
      %s115 = ssub.s32 %s18, %s25
      %p116 = scmp.eq.s32.totalorder %s115, 0
      %s118 = sadd.s32 %s117, 1
      %s119 = scalar_select %p116, %s117, %s118
      %p122 = pneg %p116
      %p123 = scmp.eq.s32.totalorder %s18, 1
      %p124 = por %p122, %p123
      %p125 = scmp.ne.s32.totalorder %s117, %s120
      %p126 = scmp.eq.s32.totalorder %s18, 0
      %p127 = por %p125, %p126
      %p128 = scmp.ne.s32.totalorder %s117, %s120
      %p129 = scmp.eq.s32.totalorder %s23, 1
      %p130 = por %p128, %p129
      %p131 = scmp.ne.s32.totalorder %s120, %s121
      %p132 = scmp.eq.s32.totalorder %s23, 0
      %p133 = por %p131, %p132
      %p134 = scmp.ne.s32.totalorder %s120, %s121
      %p135 = scmp.eq.s32.totalorder %s24, 1
      %p136 = por %p134, %p135
      %p138 = scmp.ne.s32.totalorder %s121, %s137
      %p139 = scmp.eq.s32.totalorder %s24, 0
      %p140 = por %p138, %p139
      %p141 = scmp.le.s32.totalorder 1, %s18
      %p142 = scmp.lt.s32.totalorder %s18, 3
      %p143 = pnand %p141, %p142
      %p144 = pneg %p143
      // Predicated region
      $region9: #{tpu_custom_call.1} parent=5 // pred_check
        _
      $region10: #{tpu_custom_call.1} parent=5 // pred_check_branch
        %146 = sbr.rel (%p143) target = $region12
      $region11: #{tpu_custom_call.1} parent=5 // pred_region
        %s147 = ssub.s32 %s18, 1
        // Predicated region
        $region13: #{tpu_custom_call.1} parent=11 // pred_check
          %p148 = pneg %p39
        $region14: #{tpu_custom_call.1} parent=11 // pred_check_branch
          %150 = sbr.rel (%p148) target = $region16
        $region15: #{tpu_custom_call.1} parent=11 // pred_region
          %152 = vsyncadd [#allocation6], 0
          %s154 = sshll.u32 %s0, 4
          %s155 = int_to_ptr.hbm [resolvable:$true] %s154
          %157 = dma.hbm_to_smem %s155, 16, [#allocation3], [#allocation6]
        $region16: #{tpu_custom_call.1} parent=11 // pred_fallthru
          _
        // Predicated region
        $region17: #{tpu_custom_call.1} parent=11 // pred_check
          %p158 = pneg %p60
        $region18: #{tpu_custom_call.1} parent=11 // pred_check_branch
          %160 = sbr.rel (%p158) target = $region20
        $region19: #{tpu_custom_call.1} parent=11 // pred_region
          _
        $region20: #{tpu_custom_call.1} parent=11 // pred_fallthru
          _
        // Predicated region
        $region21: #{tpu_custom_call.1} parent=11 // pred_check
          %p161 = pneg %p81
        $region22: #{tpu_custom_call.1} parent=11 // pred_check_branch
          %163 = sbr.rel (%p161) target = $region24
        $region23: #{tpu_custom_call.1} parent=11 // pred_region
          _
        $region24: #{tpu_custom_call.1} parent=11 // pred_fallthru
          _
      $region12: #{tpu_custom_call.1} parent=5 // pred_fallthru
        _
      %p164 = scmp.lt.s32.totalorder %s18, 2
      // Predicated region
      $region25: #{tpu_custom_call.1} parent=5 // pred_check
        %p165 = pneg %p164
      $region26: #{tpu_custom_call.1} parent=5 // pred_check_branch
        %167 = sbr.rel (%p165) target = $region28
      $region27: #{tpu_custom_call.1} parent=5 // pred_region
        // Predicated region
        $region29: #{tpu_custom_call.1} parent=27 // pred_check
          %p168 = pneg %p101
        $region30: #{tpu_custom_call.1} parent=27 // pred_check_branch
          %170 = sbr.rel (%p168) target = $region32
        $region31: #{tpu_custom_call.1} parent=27 // pred_region
          %s171 = sand.u32 %s91, 1
          %s172 = scalar_lea.sflag [#allocation4], %s171
          %s173 = sand.u32 %s91, 1
          %s174 = smul.addr %s173, 8
          %s175 = scalar_lea.vmem [#allocation7], %s174
          %177 = vsyncadd %s172, 0
          %s178 = smul.addr %s18, 2
          %s179 = smul.addr %s178, 4
          %s180 = scalar_lea.hbm %s3, %s179
          %s182 = sshll.u32 %s180, 4
          %s183 = int_to_ptr.hbm [resolvable:$true] %s182
          %s184 = sshll.u32 %s175, 4
          %s185 = int_to_ptr.vmem [resolvable:$true] %s184
          %187 = dma.hbm_to_vmem [thread:$0]  %s183, 128, %s185, %s172
        $region32: #{tpu_custom_call.1} parent=27 // pred_fallthru
          _
      $region28: #{tpu_custom_call.1} parent=5 // pred_fallthru
        _
      %p188 = scmp.le.s32.totalorder 1, %s18
      %p189 = scmp.lt.s32.totalorder %s18, 3
      %p190 = pnand %p188, %p189
      %p191 = pneg %p190
      // Predicated region
      $region33: #{tpu_custom_call.1} parent=5 // pred_check
        _
      $region34: #{tpu_custom_call.1} parent=5 // pred_check_branch
        %193 = sbr.rel (%p190) target = $region36
      $region35: #{tpu_custom_call.1} parent=5 // pred_region
        %s194 = ssub.s32 %s18, 1
        // Predicated region
        $region37: #{tpu_custom_call.1} parent=35 // pred_check
          %p195 = pneg %p39
        $region38: #{tpu_custom_call.1} parent=35 // pred_check_branch
          %197 = sbr.rel (%p195) target = $region40
        $region39: #{tpu_custom_call.1} parent=35 // pred_region
          %199 = dma.done [#allocation6], 16
        $region40: #{tpu_custom_call.1} parent=35 // pred_fallthru
          _
        %s200 = sand.u32 %s94, 1
        %s201 = scalar_lea.sflag [#allocation4], %s200
        %s202 = sand.u32 %s94, 1
        %s203 = smul.addr %s202, 8
        %s204 = scalar_lea.vmem [#allocation7], %s203
        // Predicated region
        $region41: #{tpu_custom_call.1} parent=35 // pred_check
          %p205 = pneg %p107
        $region42: #{tpu_custom_call.1} parent=35 // pred_check_branch
          %207 = sbr.rel (%p205) target = $region44
        $region43: #{tpu_custom_call.1} parent=35 // pred_region
          %209 = dma.done %s201, 128
        $region44: #{tpu_custom_call.1} parent=35 // pred_fallthru
          _
        %210 = sfence
        %p211 = pneg %p39
        %p212 = pneg %p36
        %p213 = pneg %p60
        %p214 = pneg %p57
        %p215 = pneg %p81
        %p216 = pneg %p78
        %s217 = sand.u32 %s94, 1
        %s218 = scalar_lea.sflag [#allocation4], %s217
        %s219 = sand.u32 %s94, 1
        %s220 = smul.addr %s219, 8
        %s221 = scalar_lea.vmem [#allocation7], %s220
        %p222 = pneg %p107
        %p223 = pneg %p104
        %p224 = pneg %p133
        %p225 = pneg %p130
        %s226 = sand.u32 %s120, 1
        %s227 = scalar_lea.sflag [#allocation5], %s226
        %s228 = sand.u32 %s120, 1
        %s229 = smul.addr %s228, 8
        %s230 = scalar_lea.vmem [#allocation8], %s229
        %v231 = vld [vmem:[%s204] sm:$0xff]
        %233 = vst [vmem:[#allocation1] ss:$2 sm:$0xff] %v231
        %v234 = vld.sshfl [vmem:[#allocation1] sm:$0xff pattern:$0x75316420]
        %v235 = vld.sshfl [vmem:[#allocation1 + $0x8] sm:$0xff pattern:$0x75316420]
        %vm238 = vcmask 1043456
        %v239 = vsel %vm238, %v234, -inf
        %v240 = vrot.slane %v239, 4
        %v241 = vmax.f32 %v239, %v240
        %v242 = vrot.slane %v241, 2
        %v243 = vmax.f32 %v241, %v242
        %v244 = vrot.slane %v243, 1
        %v245 = vmax.f32 %v243, %v244
        %v246 = vsel %vm238, %v235, -inf
        %v247 = vrot.slane %v246, 4
        %v248 = vmax.f32 %v246, %v247
        %v249 = vrot.slane %v248, 2
        %v250 = vmax.f32 %v248, %v249
        %v251 = vrot.slane %v250, 1
        %v252 = vmax.f32 %v250, %v251
        %253 = vst [vmem:[#allocation1] ss:$2 sm:$0xff] %v231
        %v254 = vld.sshfl [vmem:[#allocation1] sm:$0xff pattern:$0x75316420]
        %v255 = vld.sshfl [vmem:[#allocation1 + $0x8] sm:$0xff pattern:$0x75316420]
        %v258 = vsel %vm238, %v254, 0.0
        %v259 = vrot.slane %v258, 4
        %v260 = vadd.f32 %v258, %v259
        %v261 = vrot.slane %v260, 2
        %v262 = vadd.f32 %v260, %v261
        %v263 = vrot.slane %v262, 1
        %v264 = vadd.f32 %v262, %v263
        %v265 = vsel %vm238, %v255, 0.0
        %v266 = vrot.slane %v265, 4
        %v267 = vadd.f32 %v265, %v266
        %v268 = vrot.slane %v267, 2
        %v269 = vadd.f32 %v267, %v268
        %v270 = vrot.slane %v269, 1
        %v271 = vadd.f32 %v269, %v270
        %v272 = vmul.f32 %v264, 0.25
        %v273 = vmul.f32 %v271, 0.25
        %v274 = vld [vmem:[%s2] sm:$0x3]
        %v275 = vlaneseq
        %v276 = vand.u32 %v275, 127
        %v277 = vadd.s32 %v276, 128
        %278 = vrot.lane.b32.xlu0 %v245, 3
        %v279 = vpop.permute.xlu0 %278
        %280 = vrot.lane.b32.xlu0 %v252, 3
        %v281 = vpop.permute.xlu0 %280
        %vm282 = vcmp.lt.s32.totalorder %v276, 3
        %v283 = vsel %vm282, %v279, %v281
        %v284 = vsel %vm282, %v281, %v279
        %285 = vrot.lane.b32.xlu0 %v272, 3
        %v286 = vpop.permute.xlu0 %285
        %287 = vrot.lane.b32.xlu0 %v273, 3
        %v288 = vpop.permute.xlu0 %287
        %v289 = vsel %vm282, %v286, %v288
        %v290 = vsel %vm282, %v288, %v286
        %vm291 = vcmp.ge.s32.totalorder %v274, 3
        %v294 = vrot.slane %v283, 7
        %vm295 = vcmask 1040384
        %v296 = vsel %vm295, %v284, %v294
        %v298 = vsel %vm291, %v296, 0.0
        %v301 = vrot.slane %v289, 7
        %v302 = vsel %vm295, %v290, %v301
        %v304 = vsel %vm291, %v302, 0.0
        %305 = vrot.lane.b32.xlu0 %v245, 2
        %v306 = vpop.permute.xlu0 %305
        %307 = vrot.lane.b32.xlu0 %v252, 2
        %v308 = vpop.permute.xlu0 %307
        %vm309 = vcmp.lt.s32.totalorder %v276, 2
        %v310 = vsel %vm309, %v306, %v308
        %v311 = vsel %vm309, %v308, %v306
        %312 = vrot.lane.b32.xlu0 %v272, 2
        %v313 = vpop.permute.xlu0 %312
        %314 = vrot.lane.b32.xlu0 %v273, 2
        %v315 = vpop.permute.xlu0 %314
        %v316 = vsel %vm309, %v313, %v315
        %v317 = vsel %vm309, %v315, %v313
        %vm318 = vcmp.ge.s32.totalorder %v274, 2
        %v321 = vrot.slane %v310, 7
        %v322 = vsel %vm295, %v311, %v321
        %v324 = vsel %vm318, %v322, 0.0
        %v327 = vrot.slane %v316, 7
        %v328 = vsel %vm295, %v317, %v327
        %v330 = vsel %vm318, %v328, 0.0
        %331 = vrot.lane.b32.xlu0 %v245, 1
        %v332 = vpop.permute.xlu0 %331
        %333 = vrot.lane.b32.xlu0 %v252, 1
        %v334 = vpop.permute.xlu0 %333
        %vm335 = vcmp.lt.s32.totalorder %v276, 1
        %v336 = vsel %vm335, %v332, %v334
        %v337 = vsel %vm335, %v334, %v332
        %338 = vrot.lane.b32.xlu0 %v272, 1
        %v339 = vpop.permute.xlu0 %338
        %340 = vrot.lane.b32.xlu0 %v273, 1
        %v341 = vpop.permute.xlu0 %340
        %v342 = vsel %vm335, %v339, %v341
        %v343 = vsel %vm335, %v341, %v339
        %vm344 = vcmp.ge.s32.totalorder %v274, 1
        %v347 = vrot.slane %v336, 7
        %v348 = vsel %vm295, %v337, %v347
        %v350 = vsel %vm344, %v348, 0.0
        %v353 = vrot.slane %v342, 7
        %v354 = vsel %vm295, %v343, %v353
        %v356 = vsel %vm344, %v354, 0.0
        %357 = vrot.lane.b32.xlu0 %v245, 127
        %v358 = vpop.permute.xlu0 %357
        %359 = vrot.lane.b32.xlu0 %v252, 127
        %v360 = vpop.permute.xlu0 %359
        %vm361 = vcmp.lt.s32.totalorder %v276, 127
        %v362 = vsel %vm361, %v358, %v360
        %v363 = vsel %vm361, %v360, %v358
        %364 = vrot.lane.b32.xlu0 %v272, 127
        %v365 = vpop.permute.xlu0 %364
        %366 = vrot.lane.b32.xlu0 %v273, 127
        %v367 = vpop.permute.xlu0 %366
        %v368 = vsel %vm361, %v365, %v367
        %v369 = vsel %vm361, %v367, %v365
        %vm370 = vcmp.lt.s32.totalorder %v274, 15
        %v373 = vrot.slane %v363, 7
        %v374 = vsel %vm295, %v362, %v373
        %v376 = vsel %vm370, %v374, 0.0
        %v379 = vrot.slane %v369, 7
        %v380 = vsel %vm295, %v368, %v379
        %v382 = vsel %vm370, %v380, 0.0
        %383 = vrot.lane.b32.xlu0 %v245, 126
        %v384 = vpop.permute.xlu0 %383
        %385 = vrot.lane.b32.xlu0 %v252, 126
        %v386 = vpop.permute.xlu0 %385
        %vm387 = vcmp.lt.s32.totalorder %v276, 126
        %v388 = vsel %vm387, %v384, %v386
        %v389 = vsel %vm387, %v386, %v384
        %390 = vrot.lane.b32.xlu0 %v272, 126
        %v391 = vpop.permute.xlu0 %390
        %392 = vrot.lane.b32.xlu0 %v273, 126
        %v393 = vpop.permute.xlu0 %392
        %v394 = vsel %vm387, %v391, %v393
        %v395 = vsel %vm387, %v393, %v391
        %vm396 = vcmp.lt.s32.totalorder %v274, 14
        %v399 = vrot.slane %v389, 7
        %v400 = vsel %vm295, %v388, %v399
        %v402 = vsel %vm396, %v400, 0.0
        %v405 = vrot.slane %v395, 7
        %v406 = vsel %vm295, %v394, %v405
        %v408 = vsel %vm396, %v406, 0.0
        %409 = vrot.lane.b32.xlu0 %v245, 125
        %v410 = vpop.permute.xlu0 %409
        %411 = vrot.lane.b32.xlu0 %v252, 125
        %v412 = vpop.permute.xlu0 %411
        %vm413 = vcmp.lt.s32.totalorder %v276, 125
        %v414 = vsel %vm413, %v410, %v412
        %v415 = vsel %vm413, %v412, %v410
        %416 = vrot.lane.b32.xlu0 %v272, 125
        %v417 = vpop.permute.xlu0 %416
        %418 = vrot.lane.b32.xlu0 %v273, 125
        %v419 = vpop.permute.xlu0 %418
        %v420 = vsel %vm413, %v417, %v419
        %v421 = vsel %vm413, %v419, %v417
        %vm422 = vcmp.lt.s32.totalorder %v274, 13
        %v425 = vrot.slane %v415, 7
        %v426 = vsel %vm295, %v414, %v425
        %v428 = vsel %vm422, %v426, 0.0
        %v431 = vrot.slane %v421, 7
        %v432 = vsel %vm295, %v420, %v431
        %v434 = vsel %vm422, %v432, 0.0
        %s435 = sld [smem:[#allocation3]]
        %s436 = sld [smem:[#allocation3 + $0x31]]
        %v437 = vstv %s435
        %v438 = vmul.f32 %v437, %v298
        %v439 = vstv %s436
        %v440 = vmul.f32 %v439, %v304
        %v441 = vadd.f32 %v438, %v440
        %s442 = sld [smem:[#allocation3 + $0x1]]
        %s443 = sld [smem:[#allocation3 + $0x32]]
        %v444 = vstv %s442
        %v445 = vmul.f32 %v444, %v324
        %v446 = vstv %s443
        %v447 = vmul.f32 %v446, %v330
        %v448 = vadd.f32 %v445, %v447
        %v449 = vadd.f32 %v441, %v448
        %s450 = sld [smem:[#allocation3 + $0x2]]
        %s451 = sld [smem:[#allocation3 + $0x33]]
        %v452 = vstv %s450
        %v453 = vmul.f32 %v452, %v350
        %v454 = vstv %s451
        %v455 = vmul.f32 %v454, %v356
        %v456 = vadd.f32 %v453, %v455
        %v457 = vadd.f32 %v449, %v456
        %s458 = sld [smem:[#allocation3 + $0x3]]
        %s459 = sld [smem:[#allocation3 + $0x34]]
        %v460 = vstv %s458
        %v461 = vmul.f32 %v460, %v245
        %v462 = vmul.f32 %v460, %v252
        %v463 = vstv %s459
        %v464 = vmul.f32 %v463, %v272
        %v465 = vmul.f32 %v463, %v273
        %v466 = vadd.f32 %v461, %v464
        %v467 = vadd.f32 %v462, %v465
        %v470 = vrot.slane %v467, 7
        %v471 = vsel %vm295, %v466, %v470
        %v473 = vadd.f32 %v457, %v471
        %s474 = sld [smem:[#allocation3 + $0x4]]
        %s475 = sld [smem:[#allocation3 + $0x35]]
        %v476 = vstv %s474
        %v477 = vmul.f32 %v476, %v376
        %v478 = vstv %s475
        %v479 = vmul.f32 %v478, %v382
        %v480 = vadd.f32 %v477, %v479
        %v481 = vadd.f32 %v473, %v480
        %s482 = sld [smem:[#allocation3 + $0x5]]
        %s483 = sld [smem:[#allocation3 + $0x36]]
        %v484 = vstv %s482
        %v485 = vmul.f32 %v484, %v402
        %v486 = vstv %s483
        %v487 = vmul.f32 %v486, %v408
        %v488 = vadd.f32 %v485, %v487
        %v489 = vadd.f32 %v481, %v488
        %s490 = sld [smem:[#allocation3 + $0x6]]
        %s491 = sld [smem:[#allocation3 + $0x37]]
        %v492 = vstv %s490
        %v493 = vmul.f32 %v492, %v428
        %v494 = vstv %s491
        %v495 = vmul.f32 %v494, %v434
        %v496 = vadd.f32 %v493, %v495
        %v497 = vadd.f32 %v489, %v496
        %v499 = vperm.slane %v497, 0
        %v500 = vperm.slane %v497, 1
        %503 = vrot.lane.b32.xlu0 %v499, 48
        %v504 = vpop.permute.xlu0 %503
        %505 = vrot.lane.b32.xlu0 %v500, 48
        %v506 = vpop.permute.xlu0 %505
        %vm507 = vcmp.lt.s32.totalorder %v276, 48
        %v508 = vsel %vm507, %v504, %v506
        %v509 = vsel %vm507, %v506, %v504
        %vm510 = vcmp.ge.s32.totalorder %v276, 48
        %vm511 = vcmp.ge.s32.totalorder %v277, 48
        %v512 = vsel %vm510, %v509, 0.0
        %v513 = vsel %vm511, %v508, 0.0
        %s514 = sld [smem:[#allocation3 + $0x7]]
        %s515 = sld [smem:[#allocation3 + $0x38]]
        %v516 = vstv %s514
        %v517 = vmul.f32 %v516, %v298
        %v518 = vstv %s515
        %v519 = vmul.f32 %v518, %v304
        %v520 = vadd.f32 %v517, %v519
        %s521 = sld [smem:[#allocation3 + $0x8]]
        %s522 = sld [smem:[#allocation3 + $0x39]]
        %v523 = vstv %s521
        %v524 = vmul.f32 %v523, %v324
        %v525 = vstv %s522
        %v526 = vmul.f32 %v525, %v330
        %v527 = vadd.f32 %v524, %v526
        %v528 = vadd.f32 %v520, %v527
        %s529 = sld [smem:[#allocation3 + $0x9]]
        %s530 = sld [smem:[#allocation3 + $0x3a]]
        %v531 = vstv %s529
        %v532 = vmul.f32 %v531, %v350
        %v533 = vstv %s530
        %v534 = vmul.f32 %v533, %v356
        %v535 = vadd.f32 %v532, %v534
        %v536 = vadd.f32 %v528, %v535
        %s537 = sld [smem:[#allocation3 + $0xa]]
        %s538 = sld [smem:[#allocation3 + $0x3b]]
        %v539 = vstv %s537
        %v540 = vmul.f32 %v539, %v245
        %v541 = vmul.f32 %v539, %v252
        %v542 = vstv %s538
        %v543 = vmul.f32 %v542, %v272
        %v544 = vmul.f32 %v542, %v273
        %v545 = vadd.f32 %v540, %v543
        %v546 = vadd.f32 %v541, %v544
        %v549 = vrot.slane %v546, 7
        %v550 = vsel %vm295, %v545, %v549
        %v552 = vadd.f32 %v536, %v550
        %s553 = sld [smem:[#allocation3 + $0xb]]
        %s554 = sld [smem:[#allocation3 + $0x3c]]
        %v555 = vstv %s553
        %v556 = vmul.f32 %v555, %v376
        %v557 = vstv %s554
        %v558 = vmul.f32 %v557, %v382
        %v559 = vadd.f32 %v556, %v558
        %v560 = vadd.f32 %v552, %v559
        %s561 = sld [smem:[#allocation3 + $0xc]]
        %s562 = sld [smem:[#allocation3 + $0x3d]]
        %v563 = vstv %s561
        %v564 = vmul.f32 %v563, %v402
        %v565 = vstv %s562
        %v566 = vmul.f32 %v565, %v408
        %v567 = vadd.f32 %v564, %v566
        %v568 = vadd.f32 %v560, %v567
        %s569 = sld [smem:[#allocation3 + $0xd]]
        %s570 = sld [smem:[#allocation3 + $0x3e]]
        %v571 = vstv %s569
        %v572 = vmul.f32 %v571, %v428
        %v573 = vstv %s570
        %v574 = vmul.f32 %v573, %v434
        %v575 = vadd.f32 %v572, %v574
        %v576 = vadd.f32 %v568, %v575
        %v578 = vperm.slane %v576, 0
        %v579 = vperm.slane %v576, 1
        %582 = vrot.lane.b32.xlu0 %v578, 32
        %v583 = vpop.permute.xlu0 %582
        %584 = vrot.lane.b32.xlu0 %v579, 32
        %v585 = vpop.permute.xlu0 %584
        %vm586 = vcmp.lt.s32.totalorder %v276, 32
        %v587 = vsel %vm586, %v583, %v585
        %v588 = vsel %vm586, %v585, %v583
        %vm589 = vcmp.ge.s32.totalorder %v276, 32
        %vm590 = vcmp.ge.s32.totalorder %v277, 32
        %v591 = vsel %vm589, %v588, 0.0
        %v592 = vsel %vm590, %v587, 0.0
        %v593 = vadd.f32 %v512, %v591
        %v594 = vadd.f32 %v513, %v592
        %s595 = sld [smem:[#allocation3 + $0xe]]
        %s596 = sld [smem:[#allocation3 + $0x3f]]
        %v597 = vstv %s595
        %v598 = vmul.f32 %v597, %v298
        %v599 = vstv %s596
        %v600 = vmul.f32 %v599, %v304
        %v601 = vadd.f32 %v598, %v600
        %s602 = sld [smem:[#allocation3 + $0xf]]
        %s603 = sld [smem:[#allocation3 + $0x40]]
        %v604 = vstv %s602
        %v605 = vmul.f32 %v604, %v324
        %v606 = vstv %s603
        %v607 = vmul.f32 %v606, %v330
        %v608 = vadd.f32 %v605, %v607
        %v609 = vadd.f32 %v601, %v608
        %s610 = sld [smem:[#allocation3 + $0x10]]
        %s611 = sld [smem:[#allocation3 + $0x41]]
        %v612 = vstv %s610
        %v613 = vmul.f32 %v612, %v350
        %v614 = vstv %s611
        %v615 = vmul.f32 %v614, %v356
        %v616 = vadd.f32 %v613, %v615
        %v617 = vadd.f32 %v609, %v616
        %s618 = sld [smem:[#allocation3 + $0x11]]
        %s619 = sld [smem:[#allocation3 + $0x42]]
        %v620 = vstv %s618
        %v621 = vmul.f32 %v620, %v245
        %v622 = vmul.f32 %v620, %v252
        %v623 = vstv %s619
        %v624 = vmul.f32 %v623, %v272
        %v625 = vmul.f32 %v623, %v273
        %v626 = vadd.f32 %v621, %v624
        %v627 = vadd.f32 %v622, %v625
        %v630 = vrot.slane %v627, 7
        %v631 = vsel %vm295, %v626, %v630
        %v633 = vadd.f32 %v617, %v631
        %s634 = sld [smem:[#allocation3 + $0x12]]
        %s635 = sld [smem:[#allocation3 + $0x43]]
        %v636 = vstv %s634
        %v637 = vmul.f32 %v636, %v376
        %v638 = vstv %s635
        %v639 = vmul.f32 %v638, %v382
        %v640 = vadd.f32 %v637, %v639
        %v641 = vadd.f32 %v633, %v640
        %s642 = sld [smem:[#allocation3 + $0x13]]
        %s643 = sld [smem:[#allocation3 + $0x44]]
        %v644 = vstv %s642
        %v645 = vmul.f32 %v644, %v402
        %v646 = vstv %s643
        %v647 = vmul.f32 %v646, %v408
        %v648 = vadd.f32 %v645, %v647
        %v649 = vadd.f32 %v641, %v648
        %s650 = sld [smem:[#allocation3 + $0x14]]
        %s651 = sld [smem:[#allocation3 + $0x45]]
        %v652 = vstv %s650
        %v653 = vmul.f32 %v652, %v428
        %v654 = vstv %s651
        %v655 = vmul.f32 %v654, %v434
        %v656 = vadd.f32 %v653, %v655
        %v657 = vadd.f32 %v649, %v656
        %v659 = vperm.slane %v657, 0
        %v660 = vperm.slane %v657, 1
        %663 = vrot.lane.b32.xlu0 %v659, 16
        %v664 = vpop.permute.xlu0 %663
        %665 = vrot.lane.b32.xlu0 %v660, 16
        %v666 = vpop.permute.xlu0 %665
        %vm667 = vcmp.lt.s32.totalorder %v276, 16
        %v668 = vsel %vm667, %v664, %v666
        %v669 = vsel %vm667, %v666, %v664
        %vm670 = vcmp.ge.s32.totalorder %v276, 16
        %vm671 = vcmp.ge.s32.totalorder %v277, 16
        %v672 = vsel %vm670, %v669, 0.0
        %v673 = vsel %vm671, %v668, 0.0
        %v674 = vadd.f32 %v593, %v672
        %v675 = vadd.f32 %v594, %v673
        %s676 = sld [smem:[#allocation3 + $0x15]]
        %s677 = sld [smem:[#allocation3 + $0x46]]
        %v678 = vstv %s676
        %v679 = vmul.f32 %v678, %v298
        %v680 = vstv %s677
        %v681 = vmul.f32 %v680, %v304
        %v682 = vadd.f32 %v679, %v681
        %s683 = sld [smem:[#allocation3 + $0x16]]
        %s684 = sld [smem:[#allocation3 + $0x47]]
        %v685 = vstv %s683
        %v686 = vmul.f32 %v685, %v324
        %v687 = vstv %s684
        %v688 = vmul.f32 %v687, %v330
        %v689 = vadd.f32 %v686, %v688
        %v690 = vadd.f32 %v682, %v689
        %s691 = sld [smem:[#allocation3 + $0x17]]
        %s692 = sld [smem:[#allocation3 + $0x48]]
        %v693 = vstv %s691
        %v694 = vmul.f32 %v693, %v350
        %v695 = vstv %s692
        %v696 = vmul.f32 %v695, %v356
        %v697 = vadd.f32 %v694, %v696
        %v698 = vadd.f32 %v690, %v697
        %s699 = sld [smem:[#allocation3 + $0x18]]
        %s700 = sld [smem:[#allocation3 + $0x49]]
        %v701 = vstv %s699
        %v702 = vmul.f32 %v701, %v245
        %v703 = vmul.f32 %v701, %v252
        %v704 = vstv %s700
        %v705 = vmul.f32 %v704, %v272
        %v706 = vmul.f32 %v704, %v273
        %v707 = vadd.f32 %v702, %v705
        %v708 = vadd.f32 %v703, %v706
        %v711 = vrot.slane %v708, 7
        %v712 = vsel %vm295, %v707, %v711
        %v714 = vadd.f32 %v698, %v712
        %s715 = sld [smem:[#allocation3 + $0x19]]
        %s716 = sld [smem:[#allocation3 + $0x4a]]
        %v717 = vstv %s715
        %v718 = vmul.f32 %v717, %v376
        %v719 = vstv %s716
        %v720 = vmul.f32 %v719, %v382
        %v721 = vadd.f32 %v718, %v720
        %v722 = vadd.f32 %v714, %v721
        %s723 = sld [smem:[#allocation3 + $0x1a]]
        %s724 = sld [smem:[#allocation3 + $0x4b]]
        %v725 = vstv %s723
        %v726 = vmul.f32 %v725, %v402
        %v727 = vstv %s724
        %v728 = vmul.f32 %v727, %v408
        %v729 = vadd.f32 %v726, %v728
        %v730 = vadd.f32 %v722, %v729
        %s731 = sld [smem:[#allocation3 + $0x1b]]
        %s732 = sld [smem:[#allocation3 + $0x4c]]
        %v733 = vstv %s731
        %v734 = vmul.f32 %v733, %v428
        %v735 = vstv %s732
        %v736 = vmul.f32 %v735, %v434
        %v737 = vadd.f32 %v734, %v736
        %v738 = vadd.f32 %v730, %v737
        %v740 = vperm.slane %v738, 0
        %v741 = vperm.slane %v738, 1
        %v744 = vadd.f32 %v674, %v740
        %v745 = vadd.f32 %v675, %v741
        %s746 = sld [smem:[#allocation3 + $0x1c]]
        %s747 = sld [smem:[#allocation3 + $0x4d]]
        %v748 = vstv %s746
        %v749 = vmul.f32 %v748, %v298
        %v750 = vstv %s747
        %v751 = vmul.f32 %v750, %v304
        %v752 = vadd.f32 %v749, %v751
        %s753 = sld [smem:[#allocation3 + $0x1d]]
        %s754 = sld [smem:[#allocation3 + $0x4e]]
        %v755 = vstv %s753
        %v756 = vmul.f32 %v755, %v324
        %v757 = vstv %s754
        %v758 = vmul.f32 %v757, %v330
        %v759 = vadd.f32 %v756, %v758
        %v760 = vadd.f32 %v752, %v759
        %s761 = sld [smem:[#allocation3 + $0x1e]]
        %s762 = sld [smem:[#allocation3 + $0x4f]]
        %v763 = vstv %s761
        %v764 = vmul.f32 %v763, %v350
        %v765 = vstv %s762
        %v766 = vmul.f32 %v765, %v356
        %v767 = vadd.f32 %v764, %v766
        %v768 = vadd.f32 %v760, %v767
        %s769 = sld [smem:[#allocation3 + $0x1f]]
        %s770 = sld [smem:[#allocation3 + $0x50]]
        %v771 = vstv %s769
        %v772 = vmul.f32 %v771, %v245
        %v773 = vmul.f32 %v771, %v252
        %v774 = vstv %s770
        %v775 = vmul.f32 %v774, %v272
        %v776 = vmul.f32 %v774, %v273
        %v777 = vadd.f32 %v772, %v775
        %v778 = vadd.f32 %v773, %v776
        %v781 = vrot.slane %v778, 7
        %v782 = vsel %vm295, %v777, %v781
        %v784 = vadd.f32 %v768, %v782
        %s785 = sld [smem:[#allocation3 + $0x20]]
        %s786 = sld [smem:[#allocation3 + $0x51]]
        %v787 = vstv %s785
        %v788 = vmul.f32 %v787, %v376
        %v789 = vstv %s786
        %v790 = vmul.f32 %v789, %v382
        %v791 = vadd.f32 %v788, %v790
        %v792 = vadd.f32 %v784, %v791
        %s793 = sld [smem:[#allocation3 + $0x21]]
        %s794 = sld [smem:[#allocation3 + $0x52]]
        %v795 = vstv %s793
        %v796 = vmul.f32 %v795, %v402
        %v797 = vstv %s794
        %v798 = vmul.f32 %v797, %v408
        %v799 = vadd.f32 %v796, %v798
        %v800 = vadd.f32 %v792, %v799
        %s801 = sld [smem:[#allocation3 + $0x22]]
        %s802 = sld [smem:[#allocation3 + $0x53]]
        %v803 = vstv %s801
        %v804 = vmul.f32 %v803, %v428
        %v805 = vstv %s802
        %v806 = vmul.f32 %v805, %v434
        %v807 = vadd.f32 %v804, %v806
        %v808 = vadd.f32 %v800, %v807
        %v810 = vperm.slane %v808, 0
        %v811 = vperm.slane %v808, 1
        %814 = vrot.lane.b32.xlu0 %v810, 112
        %v815 = vpop.permute.xlu0 %814
        %816 = vrot.lane.b32.xlu0 %v811, 112
        %v817 = vpop.permute.xlu0 %816
        %vm818 = vcmp.lt.s32.totalorder %v276, 112
        %v819 = vsel %vm818, %v815, %v817
        %v820 = vsel %vm818, %v817, %v815
        %vm821 = vcmp.lt.s32.totalorder %v276, 240
        %vm822 = vcmp.lt.s32.totalorder %v277, 240
        %v823 = vsel %vm821, %v819, 0.0
        %v824 = vsel %vm822, %v820, 0.0
        %v825 = vadd.f32 %v744, %v823
        %v826 = vadd.f32 %v745, %v824
        %s827 = sld [smem:[#allocation3 + $0x23]]
        %s828 = sld [smem:[#allocation3 + $0x54]]
        %v829 = vstv %s827
        %v830 = vmul.f32 %v829, %v298
        %v831 = vstv %s828
        %v832 = vmul.f32 %v831, %v304
        %v833 = vadd.f32 %v830, %v832
        %s834 = sld [smem:[#allocation3 + $0x24]]
        %s835 = sld [smem:[#allocation3 + $0x55]]
        %v836 = vstv %s834
        %v837 = vmul.f32 %v836, %v324
        %v838 = vstv %s835
        %v839 = vmul.f32 %v838, %v330
        %v840 = vadd.f32 %v837, %v839
        %v841 = vadd.f32 %v833, %v840
        %s842 = sld [smem:[#allocation3 + $0x25]]
        %s843 = sld [smem:[#allocation3 + $0x56]]
        %v844 = vstv %s842
        %v845 = vmul.f32 %v844, %v350
        %v846 = vstv %s843
        %v847 = vmul.f32 %v846, %v356
        %v848 = vadd.f32 %v845, %v847
        %v849 = vadd.f32 %v841, %v848
        %s850 = sld [smem:[#allocation3 + $0x26]]
        %s851 = sld [smem:[#allocation3 + $0x57]]
        %v852 = vstv %s850
        %v853 = vmul.f32 %v852, %v245
        %v854 = vmul.f32 %v852, %v252
        %v855 = vstv %s851
        %v856 = vmul.f32 %v855, %v272
        %v857 = vmul.f32 %v855, %v273
        %v858 = vadd.f32 %v853, %v856
        %v859 = vadd.f32 %v854, %v857
        %v862 = vrot.slane %v859, 7
        %v863 = vsel %vm295, %v858, %v862
        %v865 = vadd.f32 %v849, %v863
        %s866 = sld [smem:[#allocation3 + $0x27]]
        %s867 = sld [smem:[#allocation3 + $0x58]]
        %v868 = vstv %s866
        %v869 = vmul.f32 %v868, %v376
        %v870 = vstv %s867
        %v871 = vmul.f32 %v870, %v382
        %v872 = vadd.f32 %v869, %v871
        %v873 = vadd.f32 %v865, %v872
        %s874 = sld [smem:[#allocation3 + $0x28]]
        %s875 = sld [smem:[#allocation3 + $0x59]]
        %v876 = vstv %s874
        %v877 = vmul.f32 %v876, %v402
        %v878 = vstv %s875
        %v879 = vmul.f32 %v878, %v408
        %v880 = vadd.f32 %v877, %v879
        %v881 = vadd.f32 %v873, %v880
        %s882 = sld [smem:[#allocation3 + $0x29]]
        %s883 = sld [smem:[#allocation3 + $0x5a]]
        %v884 = vstv %s882
        %v885 = vmul.f32 %v884, %v428
        %v886 = vstv %s883
        %v887 = vmul.f32 %v886, %v434
        %v888 = vadd.f32 %v885, %v887
        %v889 = vadd.f32 %v881, %v888
        %v891 = vperm.slane %v889, 0
        %v892 = vperm.slane %v889, 1
        %895 = vrot.lane.b32.xlu0 %v891, 96
        %v896 = vpop.permute.xlu0 %895
        %897 = vrot.lane.b32.xlu0 %v892, 96
        %v898 = vpop.permute.xlu0 %897
        %vm899 = vcmp.lt.s32.totalorder %v276, 96
        %v900 = vsel %vm899, %v896, %v898
        %v901 = vsel %vm899, %v898, %v896
        %vm902 = vcmp.lt.s32.totalorder %v276, 224
        %vm903 = vcmp.lt.s32.totalorder %v277, 224
        %v904 = vsel %vm902, %v900, 0.0
        %v905 = vsel %vm903, %v901, 0.0
        %v906 = vadd.f32 %v825, %v904
        %v907 = vadd.f32 %v826, %v905
        %s908 = sld [smem:[#allocation3 + $0x2a]]
        %s909 = sld [smem:[#allocation3 + $0x5b]]
        %v910 = vstv %s908
        %v911 = vmul.f32 %v910, %v298
        %v912 = vstv %s909
        %v913 = vmul.f32 %v912, %v304
        %v914 = vadd.f32 %v911, %v913
        %s915 = sld [smem:[#allocation3 + $0x2b]]
        %s916 = sld [smem:[#allocation3 + $0x5c]]
        %v917 = vstv %s915
        %v918 = vmul.f32 %v917, %v324
        %v919 = vstv %s916
        %v920 = vmul.f32 %v919, %v330
        %v921 = vadd.f32 %v918, %v920
        %v922 = vadd.f32 %v914, %v921
        %s923 = sld [smem:[#allocation3 + $0x2c]]
        %s924 = sld [smem:[#allocation3 + $0x5d]]
        %v925 = vstv %s923
        %v926 = vmul.f32 %v925, %v350
        %v927 = vstv %s924
        %v928 = vmul.f32 %v927, %v356
        %v929 = vadd.f32 %v926, %v928
        %v930 = vadd.f32 %v922, %v929
        %s931 = sld [smem:[#allocation3 + $0x2d]]
        %s932 = sld [smem:[#allocation3 + $0x5e]]
        %v933 = vstv %s931
        %v934 = vmul.f32 %v933, %v245
        %v935 = vmul.f32 %v933, %v252
        %v936 = vstv %s932
        %v937 = vmul.f32 %v936, %v272
        %v938 = vmul.f32 %v936, %v273
        %v939 = vadd.f32 %v934, %v937
        %v940 = vadd.f32 %v935, %v938
        %v943 = vrot.slane %v940, 7
        %v944 = vsel %vm295, %v939, %v943
        %v946 = vadd.f32 %v930, %v944
        %s947 = sld [smem:[#allocation3 + $0x2e]]
        %s948 = sld [smem:[#allocation3 + $0x5f]]
        %v949 = vstv %s947
        %v950 = vmul.f32 %v949, %v376
        %v951 = vstv %s948
        %v952 = vmul.f32 %v951, %v382
        %v953 = vadd.f32 %v950, %v952
        %v954 = vadd.f32 %v946, %v953
        %s955 = sld [smem:[#allocation3 + $0x2f]]
        %s956 = sld [smem:[#allocation3 + $0x60]]
        %v957 = vstv %s955
        %v958 = vmul.f32 %v957, %v402
        %v959 = vstv %s956
        %v960 = vmul.f32 %v959, %v408
        %v961 = vadd.f32 %v958, %v960
        %v962 = vadd.f32 %v954, %v961
        %s963 = sld [smem:[#allocation3 + $0x30]]
        %s964 = sld [smem:[#allocation3 + $0x61]]
        %v965 = vstv %s963
        %v966 = vmul.f32 %v965, %v428
        %v967 = vstv %s964
        %v968 = vmul.f32 %v967, %v434
        %v969 = vadd.f32 %v966, %v968
        %v970 = vadd.f32 %v962, %v969
        %v972 = vperm.slane %v970, 0
        %v973 = vperm.slane %v970, 1
        %976 = vrot.lane.b32.xlu0 %v972, 80
        %v977 = vpop.permute.xlu0 %976
        %978 = vrot.lane.b32.xlu0 %v973, 80
        %v979 = vpop.permute.xlu0 %978
        %vm980 = vcmp.lt.s32.totalorder %v276, 80
        %v981 = vsel %vm980, %v977, %v979
        %v982 = vsel %vm980, %v979, %v977
        %vm983 = vcmp.lt.s32.totalorder %v276, 208
        %vm984 = vcmp.lt.s32.totalorder %v277, 208
        %v985 = vsel %vm983, %v981, 0.0
        %v986 = vsel %vm984, %v982, 0.0
        %v987 = vadd.f32 %v906, %v985
        %v988 = vadd.f32 %v907, %v986
        %s989 = sld [smem:[#allocation2]]
        %v990 = vstv %s989
        %v991 = vadd.f32 %v987, %v990
        %v992 = vadd.f32 %v988, %v990
        %v993 = vxor.u32 %v991, 2147483648
        %v994 = vxor.u32 %v992, 2147483648
        %v995 = vmul.f32 %v993, 1.442695
        %v996 = vpow.pop %v995
        %v997 = vmul.f32 %v994, 1.442695
        %v998 = vpow.pop %v997
        %v999 = vadd.f32 %v996, 1.0
        %v1000 = vadd.f32 %v998, 1.0
        %v1001 = vrcp.pop %v999
        %v1002 = vmul.f32 %v999, %v1001
        %v1003 = vsub.f32 1.0, %v1002
        %v1004 = vmul.f32 %v1001, %v1003
        %v1005 = vadd.f32 %v1001, %v1004
        %vm1006 = vweird.f32 %v999
        %vm1007 = vweird.f32 %v1001
        %vm1008 = vmor %vm1006, %vm1007
        %v1009 = vsel %vm1008, %v1001, %v1005
        %v1010 = vand.u32 2147483647, %v999
        %vm1011 = vcmp.eq.f32.partialorder %v1010, 8.507059e+37
        %v1012 = vand.u32 %v999, 2147483648
        %v1013 = vor.u32 1.1754944e-38, %v1012
        %v1014 = vsel %vm1011, %v1013, %v1009
        %v1015 = vmul.f32 1.0, %v1014
        %v1016 = vrcp.pop %v1000
        %v1017 = vmul.f32 %v1000, %v1016
        %v1018 = vsub.f32 1.0, %v1017
        %v1019 = vmul.f32 %v1016, %v1018
        %v1020 = vadd.f32 %v1016, %v1019
        %vm1021 = vweird.f32 %v1000
        %vm1022 = vweird.f32 %v1016
        %vm1023 = vmor %vm1021, %vm1022
        %v1024 = vsel %vm1023, %v1016, %v1020
        %v1025 = vand.u32 2147483647, %v1000
        %vm1026 = vcmp.eq.f32.partialorder %v1025, 8.507059e+37
        %v1027 = vand.u32 %v1000, 2147483648
        %v1028 = vor.u32 1.1754944e-38, %v1027
        %v1029 = vsel %vm1026, %v1028, %v1024
        %v1030 = vmul.f32 1.0, %v1029
        %v1031 = vperm.slane %v1015, 0
        %v1032 = vperm.slane %v1030, 0
        %v1035 = vrot.slane %v1032, 4
        %v1036 = vsel %vm238, %v1031, %v1035
        %v1038 = vmul.f32 %v231, %v1036
        %1039 = vst [vmem:[%s230] sm:$0xff] %v1038
        %s1040 = sand.u32 %s120, 1
        %s1041 = scalar_lea.sflag [#allocation5], %s1040
        %s1042 = sand.u32 %s120, 1
        %s1043 = smul.addr %s1042, 8
        %s1044 = scalar_lea.vmem [#allocation8], %s1043
        // Predicated region
        $region45: #{tpu_custom_call.1} parent=35 // pred_check
          %p1045 = pneg %p130
        $region46: #{tpu_custom_call.1} parent=35 // pred_check_branch
          %1047 = sbr.rel (%p1045) target = $region48
        $region47: #{tpu_custom_call.1} parent=35 // pred_region
          %1049 = vsyncadd %s1041, 0
          %s1050 = smul.addr %s23, 2
          %s1051 = smul.addr %s1050, 4
          %s1052 = scalar_lea.hbm %s4, %s1051
          %s1054 = sshll.u32 %s1044, 4
          %s1055 = int_to_ptr.vmem [resolvable:$true] %s1054
          %s1056 = sshll.u32 %s1052, 4
          %s1057 = int_to_ptr.hbm [resolvable:$true] %s1056
          %1059 = dma.vmem_to_hbm [thread:$0]  %s1055, 128, %s1057, %s1041
        $region48: #{tpu_custom_call.1} parent=35 // pred_fallthru
          _
      $region36: #{tpu_custom_call.1} parent=5 // pred_fallthru
        _
      %p1060 = scmp.le.s32.totalorder 2, %s18
      // Predicated region
      $region49: #{tpu_custom_call.1} parent=5 // pred_check
        %p1061 = pneg %p1060
      $region50: #{tpu_custom_call.1} parent=5 // pred_check_branch
        %1063 = sbr.rel (%p1061) target = $region52
      $region51: #{tpu_custom_call.1} parent=5 // pred_region
        %s1064 = ssub.s32 %s18, 2
        // Predicated region
        $region53: #{tpu_custom_call.1} parent=51 // pred_check
          %p1065 = pneg %p136
        $region54: #{tpu_custom_call.1} parent=51 // pred_check_branch
          %1067 = sbr.rel (%p1065) target = $region56
        $region55: #{tpu_custom_call.1} parent=51 // pred_region
          %s1068 = sand.u32 %s121, 1
          %s1069 = scalar_lea.sflag [#allocation5], %s1068
          %s1070 = sand.u32 %s121, 1
          %s1071 = smul.addr %s1070, 8
          %s1072 = scalar_lea.vmem [#allocation8], %s1071
          %1074 = dma.done %s1069, 128
        $region56: #{tpu_custom_call.1} parent=51 // pred_fallthru
          _
      $region52: #{tpu_custom_call.1} parent=5 // pred_fallthru
        _
    $region6: #{tpu_custom_call.1} parent=1 // loop_footer
      %s22 = sadd.s32 1, %s18
    $region7: #{tpu_custom_call.1} parent=1 // loop_footer_branch
      %17 = sbr.rel target = $region3
    $region8: #{tpu_custom_call.1} parent=1 // loop_exit
      _
    %1075 = vsyncpa [#allocation4], 1
    %s1076 = scalar_lea.sflag [#allocation4], 1
    %1077 = vsyncpa %s1076, 1
    %1078 = vsyncpa [#allocation5], 1
    %s1079 = scalar_lea.sflag [#allocation5], 1
    %1080 = vsyncpa %s1079, 1
    %1081 = vsyncpa [#allocation6], 1
    %s1082 = scalar_lea.sflag [#allocation6], 1
    %1083 = vsyncpa %s1082, 1

</llo_original>
